<compile_context>
chip_gen: v7x
topology: tpu7x:2x2x1
jax: 0.10.0
libtpu: 0.0.40
codegen_flags: <defaults>
</compile_context>

<pallas_src>
import functools

import jax
import jax.numpy as jnp
from jax import lax
from jax.experimental import pallas as pl
from jax.experimental.pallas import tpu as pltpu


_NEG_SLOPE = 0.01   # nn.LeakyReLU() default
_EPS = 1e-5         # BatchNorm2d / InstanceNorm2d default


def _vmem_capacity_bytes(default=64 * 2**20):
    """Physical per-core VMEM (generation-aware), conservative fallback 64 MiB."""
    try:
        info = pltpu.get_tpu_info()
    except Exception:
        return default
    for name in ("vmem_capacity_bytes", "vmem_bytes", "vmem_size_bytes"):
        val = getattr(info, name, None)
        if val:
            return int(val)
    return default


def _make_conv_kernel(norm, Ho, Wo):
    """3x3 conv + bias + LeakyReLU (+ InstanceNorm, or BatchNorm partial stats).

    Per grid step (one batch sample x one Cout tile):
      x_ref : (1, Hp, Wp, Cin)     padded input, NHWC, compute dtype
      w_ref : (3, tCout, 3*Cin)    taps folded along K: dy-major, K ordered (dx, Cin)
      b_ref : (tCout, 1)           f32 bias
      o_ref : (1, tCout, Ho*Wo)    activation, lane-dense on Ho*Wo (== NCHW layout)
      s_ref : (1, tCout, 2)        [BN only] per-sample (sum, sumsq) over Ho*Wo
    """
    P = Ho * Wo

    def kernel(x_ref, w_ref, b_ref, o_ref, *maybe_stats):
        Cin = x_ref.shape[-1]
        t_cout = o_ref.shape[1]

        # Three dx-shifted views concatenated along the channel axis so the 3x3
        # taps fold into the matmul contraction (K = 3*Cin per dy offset).
        xcat = jnp.concatenate(
            [x_ref[0, :, dx:dx + Wo, :] for dx in range(3)], axis=-1)
        xcat = xcat.reshape(-1, 3 * Cin)                        # (Hp*Wo, 3*Cin)

        # Accumulator laid out (tCout, P): spatial product on the lane axis.
        # 3 MXU matmuls (K=3*Cin) in "NT" orientation, f32 accumulation.
        acc = jnp.zeros((t_cout, P), jnp.float32)
        for dy in range(3):
            patch = xcat[dy * Wo:dy * Wo + P, :]                # (P, 3*Cin)
            acc = acc + lax.dot_general(
                w_ref[dy], patch, (((1,), (1,)), ((), ())),
                preferred_element_type=jnp.float32)

        acc = acc + b_ref[...]                                  # (tCout,1) bcast
        acc = jnp.where(acc >= 0.0, acc, _NEG_SLOPE * acc)      # LeakyReLU

        if norm == "IN":
            # Two-pass per-(sample, channel) stats: no E[x^2]-E[x]^2 cancellation,
            # everything stays in VMEM (lane reductions only).
            mean = jnp.sum(acc, axis=1, keepdims=True) * (1.0 / P)
            cen = acc - mean
            var = jnp.sum(cen * cen, axis=1, keepdims=True) * (1.0 / P)
            acc = cen * lax.rsqrt(var + _EPS)
        elif norm == "BN":
            # Streaming partial stats, folded across the batch outside the kernel.
            # TODO(synk): shifted/Welford sums would be more robust for huge N*P.
            s_ref, = maybe_stats
            s_ref[0, :, 0:1] = jnp.sum(acc, axis=1, keepdims=True)
            s_ref[0, :, 1:2] = jnp.sum(acc * acc, axis=1, keepdims=True)

        o_ref[0, :, :] = acc.astype(o_ref.dtype)

    return kernel


def _bn_apply_kernel(a_ref, s_ref, t_ref, o_ref):
    """Finalize pass: y = a * scale_c + shift_c (per-channel)."""
    a = a_ref[0, :, :].astype(jnp.float32)
    o_ref[0, :, :] = (a * s_ref[...] + t_ref[...]).astype(o_ref.dtype)


@functools.partial(jax.jit,
                   static_argnames=("padding", "norm", "compute_dtype", "out_dtype"))
def msunet_conv_block(x_nchw, weight, bias, gamma, beta, *,
                      padding=1, norm="BN", compute_dtype="bfloat16",
                      out_dtype=None):
    """Forward pass of MSUNetConvBlock.

    x_nchw : (N, Cin, H, W) f32, weight : (Cout, Cin, 3, 3), bias/gamma/beta : (Cout,)
    out_dtype defaults to compute_dtype (pass "float32" for an f32 result).
    """
    cdtype = jnp.dtype(compute_dtype)
    odtype = cdtype if out_dtype is None else jnp.dtype(out_dtype)
    N, Cin, H, W = x_nchw.shape
    Cout = weight.shape[0]
    p = int(padding)
    Hp, Wp = H + 2 * p, W + 2 * p
    Ho, Wo = Hp - 2, Wp - 2
    P = Ho * Wo

    phys_vmem = _vmem_capacity_bytes()
    vmem_cap = int(0.8 * phys_vmem)            # never exceed physical VMEM (v7x!)

    # NCHW -> padded NHWC (one fused XLA copy) + cast to the MXU compute dtype.
    x = jnp.transpose(x_nchw, (0, 2, 3, 1))
    x = jnp.pad(x, ((0, 0), (p, p), (p, p), (0, 0))).astype(cdtype)

    # (Cout, Cin, 3, 3) -> (3, Cout, 3*Cin): dy major, K axis ordered (dx, Cin)
    # to match the in-kernel dx concatenation.
    w3 = jnp.transpose(weight, (2, 3, 1, 0)).reshape(3, 3 * Cin, Cout)
    w3 = jnp.transpose(w3, (0, 2, 1)).astype(cdtype)
    b2 = bias.reshape(Cout, 1).astype(jnp.float32)

    inter_dtype = cdtype if norm == "BN" else odtype
    inter_sz = jnp.dtype(inter_dtype).itemsize
    csz = cdtype.itemsize

    # Cout tiling (parallel grid axis) keeps the f32 accumulator + activation
    # blocks inside the per-step budget and adds megacore parallelism.
    t_cout = Cout
    step_budget = min(12 * 2**20, vmem_cap // 4)
    while (t_cout % 16 == 0 and t_cout > 128
           and t_cout * P * (4 + 2 * inter_sz) > step_budget):
        t_cout //= 2
    n_co = Cout // t_cout

    kernel = _make_conv_kernel(norm, Ho, Wo)

    # Per-step VMEM estimate: double-buffered blocks + in-kernel temporaries
    # (concatenated/relaid-out x views, f32 accumulator, elementwise temps).
    x_block = Hp * Wp * Cin * csz
    est = (2 * x_block
           + 2 * 9 * t_cout * Cin * csz
           + 2 * t_cout * P * inter_sz
           + 2 * t_cout * 2 * 4
           + 2 * Hp * Wo * 3 * Cin * csz      # xcat + relayout copies
           + 2 * t_cout * P * 4)              # f32 acc + elementwise temps
    # Deeper input pipelining only when the x DMA is small & exposed and VMEM allows.
    deep_x = (N * n_co >= 8 and x_block <= 2 * 2**20
              and est + x_block <= vmem_cap)
    if deep_x:
        est += x_block
        x_spec = pl.BlockSpec((1, Hp, Wp, Cin), lambda n, co: (n, 0, 0, 0),
                              pipeline_mode=pl.Buffered(3))
    else:
        x_spec = pl.BlockSpec((1, Hp, Wp, Cin), lambda n, co: (n, 0, 0, 0))

    vmem_limit = int(min(vmem_cap, max(int(1.25 * est), 32 * 2**20)))

    w_spec = pl.BlockSpec((3, t_cout, 3 * Cin), lambda n, co: (0, co, 0))
    b_spec = pl.BlockSpec((t_cout, 1), lambda n, co: (co, 0))
    act_spec = pl.BlockSpec((1, t_cout, P), lambda n, co: (n, co, 0))
    conv_params = pltpu.CompilerParams(
        dimension_semantics=("parallel", "parallel"),
        vmem_limit_bytes=vmem_limit)

    if norm == "BN":
        act, stats = pl.pallas_call(
            kernel,
            out_shape=(jax.ShapeDtypeStruct((N, Cout, P), inter_dtype),
                       jax.ShapeDtypeStruct((N, Cout, 2), jnp.float32)),
            grid=(N, n_co),
            in_specs=[x_spec, w_spec, b_spec],
            out_specs=(act_spec,
                       pl.BlockSpec((1, t_cout, 2), lambda n, co: (n, co, 0))),
            compiler_params=conv_params,
        )(x, w3, b2)

        # Fold per-sample partial sums into batch statistics (tiny XLA reduce).
        cnt = float(N * P)
        tot = jnp.sum(stats, axis=0)                        # (Cout, 2)
        mean = tot[:, 0] / cnt
        var = jnp.maximum(tot[:, 1] / cnt - mean * mean, 0.0)
        scale = gamma.astype(jnp.float32) * lax.rsqrt(var + _EPS)
        shift = beta.astype(jnp.float32) - mean * scale
        scale = scale.reshape(Cout, 1)
        shift = shift.reshape(Cout, 1)

        # Finalize pass (pure HBM-bound elementwise): budget-aware spatial tile,
        # output in odtype so the in-place alias fires in the default bf16 path.
        osz = odtype.itemsize
        fin_budget = min(24 * 2**20, int(0.35 * phys_vmem))
        per_col = 2 * Cout * (inter_sz + osz)     # dbl-buffered in+out per lane elem
        if P * per_col <= fin_budget:
            tile_hw, n_hw = P, 1
        else:
            tile_hw = max(128, (fin_budget // per_col) // 128 * 128)
            n_hw = pl.cdiv(P, tile_hw)
        fin_vmem = int(min(vmem_cap,
                           max(tile_hw * per_col + 8 * Cout + 2 * 2**20,
                               32 * 2**20)))
        alias = {0: 0} if inter_dtype == odtype else {}
        out = pl.pallas_call(
            _bn_apply_kernel,
            out_shape=jax.ShapeDtypeStruct((N, Cout, P), odtype),
            grid=(N, n_hw),
            in_specs=[pl.BlockSpec((1, Cout, tile_hw), lambda n, t: (n, 0, t)),
                      pl.BlockSpec((Cout, 1), lambda n, t: (0, 0)),
                      pl.BlockSpec((Cout, 1), lambda n, t: (0, 0))],
            out_specs=pl.BlockSpec((1, Cout, tile_hw), lambda n, t: (n, 0, t)),
            input_output_aliases=alias,
            compiler_params=pltpu.CompilerParams(
                dimension_semantics=("parallel", "parallel"),
                vmem_limit_bytes=fin_vmem),
        )(act, scale, shift)
    else:  # "IN" or no norm: fully fused single pass.
        out = pl.pallas_call(
            kernel,
            out_shape=jax.ShapeDtypeStruct((N, Cout, P), odtype),
            grid=(N, n_co),
            in_specs=[x_spec, w_spec, b_spec],
            out_specs=act_spec,
            compiler_params=conv_params,
        )(x, w3, b2)

    # (N, Cout, Ho*Wo) -> (N, Cout, Ho, Wo): contiguous split, no data movement.
    return out.reshape(N, Cout, Ho, Wo)


def _reference(x_nchw, weight, bias, gamma, beta, padding, norm):
    """Pure-JAX reference (mirrors PyTorch forward semantics, f32)."""
    out = lax.conv_general_dilated(
        x_nchw, weight, window_strides=(1, 1),
        padding=[(padding, padding), (padding, padding)],
        dimension_numbers=("NCHW", "OIHW", "NCHW"))
    out = out + bias.reshape(1, -1, 1, 1)
    out = jnp.where(out >= 0, out, _NEG_SLOPE * out)
    if norm == "BN":
        mean = out.mean(axis=(0, 2, 3), keepdims=True)
        var = jnp.square(out - mean).mean(axis=(0, 2, 3), keepdims=True)
        out = (out - mean) * lax.rsqrt(var + _EPS)
        out = out * gamma.reshape(1, -1, 1, 1) + beta.reshape(1, -1, 1, 1)
    elif norm == "IN":
        mean = out.mean(axis=(2, 3), keepdims=True)
        var = jnp.square(out - mean).mean(axis=(2, 3), keepdims=True)
        out = (out - mean) * lax.rsqrt(var + _EPS)
    return out


if __name__ == "__main__":
    N, Cin, Cout, H, W = 2, 4, 8, 16, 16
    padding = 1

    key = jax.random.PRNGKey(0)
    kx, kw, kb = jax.random.split(key, 3)
    x = jax.random.normal(kx, (N, Cin, H, W), jnp.float32)
    weight = jax.random.normal(kw, (Cout, Cin, 3, 3), jnp.float32) * 0.1
    bias = jax.random.normal(kb, (Cout,), jnp.float32) * 0.1
    gamma = jnp.ones((Cout,), jnp.float32)   # BatchNorm2d affine init
    beta = jnp.zeros((Cout,), jnp.float32)

    ok = True
    for norm in ("BN", "IN", None):
        ref = _reference(x, weight, bias, gamma, beta, padding, norm)
        for cdt, tol in (("float32", 1e-3), ("bfloat16", 1e-1)):
            out = msunet_conv_block(x, weight, bias, gamma, beta,
                                    padding=padding, norm=norm,
                                    compute_dtype=cdt)
            out = jax.block_until_ready(out)
            err = float(jnp.max(jnp.abs(out.astype(jnp.float32) - ref)))
            if not (out.shape == ref.shape and err < tol):
                ok = False
                print(f"norm={norm} dtype={cdt} mismatch: max_abs_err={err}")

    if ok:
        print("KERNEL_OK")
</pallas_src>

<mosaic_0001>
module attributes {stable_mosaic.version = 11 : i64} {
  func.func @_bn_apply_kernel(%arg0: i32, %arg1: i32, %arg2: memref<1x8x256xf32, #tpu.memory_space<vmem>>, %arg3: memref<8x1xf32, #tpu.memory_space<vmem>>, %arg4: memref<8x1xf32, #tpu.memory_space<vmem>>, %arg5: memref<1x8x256xf32, #tpu.memory_space<vmem>>) attributes {dimension_semantics = [#tpu.dimension_semantics<parallel>, #tpu.dimension_semantics<parallel>], iteration_bounds = array<i64: 2, 1>, scalar_prefetch = 0 : i64, scratch_operands = 0 : i64, tpu.core_type = #tpu.core_type<tc>, window_params = [{transform_indices = @transform_0, window_bounds = array<i64: 1, 8, 256>}, {pipeline_mode = #tpu.pipeline_mode<synchronous>, transform_indices = @transform_1, window_bounds = array<i64: 8, 1>}, {pipeline_mode = #tpu.pipeline_mode<synchronous>, transform_indices = @transform_2, window_bounds = array<i64: 8, 1>}, {transform_indices = @transform_3, window_bounds = array<i64: 1, 8, 256>}]} {
    %c0 = arith.constant 0 : index
    %c0_0 = arith.constant 0 : index
    %c0_1 = arith.constant 0 : index
    %0 = vector.load %arg2[%c0, %c0_0, %c0_1] : memref<1x8x256xf32, #tpu.memory_space<vmem>>, vector<1x8x256xf32>
    %1 = vector.shape_cast %0 : vector<1x8x256xf32> to vector<8x256xf32>
    %c0_2 = arith.constant 0 : index
    %c0_3 = arith.constant 0 : index
    %2 = vector.load %arg3[%c0_2, %c0_3] : memref<8x1xf32, #tpu.memory_space<vmem>>, vector<8x1xf32>
    %3 = vector.broadcast %2 : vector<8x1xf32> to vector<8x256xf32>
    %4 = arith.mulf %1, %3 : vector<8x256xf32>
    %c0_4 = arith.constant 0 : index
    %c0_5 = arith.constant 0 : index
    %5 = vector.load %arg4[%c0_4, %c0_5] : memref<8x1xf32, #tpu.memory_space<vmem>>, vector<8x1xf32>
    %6 = vector.broadcast %5 : vector<8x1xf32> to vector<8x256xf32>
    %7 = arith.addf %4, %6 : vector<8x256xf32>
    %c0_6 = arith.constant 0 : index
    %c0_7 = arith.constant 0 : index
    %c0_8 = arith.constant 0 : index
    %8 = vector.load %arg5[%c0_6, %c0_7, %c0_8] : memref<1x8x256xf32, #tpu.memory_space<vmem>>, vector<1x8x256xf32>
    %9 = vector.shape_cast %8 : vector<1x8x256xf32> to vector<8x256xf32>
    %10 = vector.shape_cast %7 : vector<8x256xf32> to vector<1x8x256xf32>
    tpu.vector_store %arg5[%c0_6, %c0_7, %c0_8], %10 {strides = array<i32>} : memref<1x8x256xf32, #tpu.memory_space<vmem>>, vector<1x8x256xf32>,
    return
  }
  func.func @transform_0(%arg0: i32, %arg1: i32) -> (i32, i32, i32) {
    %c0_i32 = arith.constant 0 : i32
    %c0_i32_0 = arith.constant 0 : i32
    return %arg0, %c0_i32, %arg1 : i32, i32, i32
  }
  func.func @transform_1(%arg0: i32, %arg1: i32) -> (i32, i32) {
    %c0_i32 = arith.constant 0 : i32
    %c0_i32_0 = arith.constant 0 : i32
    %c0_i32_1 = arith.constant 0 : i32
    return %c0_i32, %c0_i32_0 : i32, i32
  }
  func.func @transform_2(%arg0: i32, %arg1: i32) -> (i32, i32) {
    %c0_i32 = arith.constant 0 : i32
    %c0_i32_0 = arith.constant 0 : i32
    %c0_i32_1 = arith.constant 0 : i32
    return %c0_i32, %c0_i32_0 : i32, i32
  }
  func.func @transform_3(%arg0: i32, %arg1: i32) -> (i32, i32, i32) {
    %c0_i32 = arith.constant 0 : i32
    %c0_i32_0 = arith.constant 0 : i32
    return %arg0, %c0_i32, %arg1 : i32, i32, i32
  }
}

module attributes {stable_mosaic.version = 11 : i64} {
  func.func @kernel(%arg0: i32, %arg1: i32, %arg2: memref<1x18x18x4xf32, #tpu.memory_space<vmem>>, %arg3: memref<3x8x12xf32, #tpu.memory_space<vmem>>, %arg4: memref<8x1xf32, #tpu.memory_space<vmem>>, %arg5: memref<1x8x256xf32, #tpu.memory_space<vmem>>, %arg6: memref<1x8x2xf32, #tpu.memory_space<vmem>>) attributes {dimension_semantics = [#tpu.dimension_semantics<parallel>, #tpu.dimension_semantics<parallel>], iteration_bounds = array<i64: 2, 1>, scalar_prefetch = 0 : i64, scratch_operands = 0 : i64, tpu.core_type = #tpu.core_type<tc>, window_params = [{transform_indices = @transform_0, window_bounds = array<i64: 1, 18, 18, 4>}, {transform_indices = @transform_1, window_bounds = array<i64: 3, 8, 12>}, {transform_indices = @transform_2, window_bounds = array<i64: 8, 1>}, {transform_indices = @transform_3, window_bounds = array<i64: 1, 8, 256>}, {transform_indices = @transform_4, window_bounds = array<i64: 1, 8, 2>}]} {
    %c0 = arith.constant 0 : index
    %c0_0 = arith.constant 0 : index
    %c0_1 = arith.constant 0 : index
    %c0_2 = arith.constant 0 : index
    %0 = vector.load %arg2[%c0, %c0_0, %c0_1, %c0_2] : memref<1x18x18x4xf32, #tpu.memory_space<vmem>>, vector<1x18x16x4xf32>
    %1 = vector.shape_cast %0 : vector<1x18x16x4xf32> to vector<18x16x4xf32>
    %c0_3 = arith.constant 0 : index
    %c0_4 = arith.constant 0 : index
    %c1 = arith.constant 1 : index
    %c0_5 = arith.constant 0 : index
    %2 = vector.load %arg2[%c0_3, %c0_4, %c1, %c0_5] : memref<1x18x18x4xf32, #tpu.memory_space<vmem>>, vector<1x18x16x4xf32>
    %3 = vector.shape_cast %2 : vector<1x18x16x4xf32> to vector<18x16x4xf32>
    %c0_6 = arith.constant 0 : index
    %c0_7 = arith.constant 0 : index
    %c2 = arith.constant 2 : index
    %c0_8 = arith.constant 0 : index
    %4 = vector.load %arg2[%c0_6, %c0_7, %c2, %c0_8] : memref<1x18x18x4xf32, #tpu.memory_space<vmem>>, vector<1x18x16x4xf32>
    %5 = vector.shape_cast %4 : vector<1x18x16x4xf32> to vector<18x16x4xf32>
    %6 = tpu.concatenate %1, %3, %5 in 2 : vector<18x16x4xf32>, vector<18x16x4xf32>, vector<18x16x4xf32> -> vector<18x16x12xf32>
    %7 = vector.shape_cast %6 : vector<18x16x12xf32> to vector<288x12xf32>
    %cst = arith.constant 0.000000e+00 : f32
    %8 = vector.broadcast %cst : f32 to vector<8x256xf32>
    %9 = vector.extract_strided_slice %7 {offsets = [0, 0], sizes = [256, 12], strides = [1, 1]} : vector<288x12xf32> to vector<256x12xf32>
    %c0_9 = arith.constant 0 : index
    %c0_10 = arith.constant 0 : index
    %c0_11 = arith.constant 0 : index
    %10 = vector.load %arg3[%c0_9, %c0_10, %c0_11] : memref<3x8x12xf32, #tpu.memory_space<vmem>>, vector<1x8x12xf32>
    %11 = vector.shape_cast %10 : vector<1x8x12xf32> to vector<8x12xf32>
    %cst_12 = arith.constant dense<0.000000e+00> : vector<8x256xf32>
    %12 = tpu.matmul %11, %9, %cst_12 {dimension_numbers = #tpu.dot_dimension_numbers<[1], [1], [0], [0], [0, 0, 1, 0], [], []>} : vector<8x12xf32>, vector<256x12xf32>, vector<8x256xf32> -> vector<8x256xf32>
    %13 = arith.addf %8, %12 : vector<8x256xf32>
    %14 = vector.extract_strided_slice %7 {offsets = [16, 0], sizes = [256, 12], strides = [1, 1]} : vector<288x12xf32> to vector<256x12xf32>
    %c1_13 = arith.constant 1 : index
    %c0_14 = arith.constant 0 : index
    %c0_15 = arith.constant 0 : index
    %15 = vector.load %arg3[%c1_13, %c0_14, %c0_15] : memref<3x8x12xf32, #tpu.memory_space<vmem>>, vector<1x8x12xf32>
    %16 = vector.shape_cast %15 : vector<1x8x12xf32> to vector<8x12xf32>
    %cst_16 = arith.constant dense<0.000000e+00> : vector<8x256xf32>
    %17 = tpu.matmul %16, %14, %cst_16 {dimension_numbers = #tpu.dot_dimension_numbers<[1], [1], [0], [0], [0, 0, 1, 0], [], []>} : vector<8x12xf32>, vector<256x12xf32>, vector<8x256xf32> -> vector<8x256xf32>
    %18 = arith.addf %13, %17 : vector<8x256xf32>
    %19 = vector.extract_strided_slice %7 {offsets = [32, 0], sizes = [256, 12], strides = [1, 1]} : vector<288x12xf32> to vector<256x12xf32>
    %c2_17 = arith.constant 2 : index
    %c0_18 = arith.constant 0 : index
    %c0_19 = arith.constant 0 : index
    %20 = vector.load %arg3[%c2_17, %c0_18, %c0_19] : memref<3x8x12xf32, #tpu.memory_space<vmem>>, vector<1x8x12xf32>
    %21 = vector.shape_cast %20 : vector<1x8x12xf32> to vector<8x12xf32>
    %cst_20 = arith.constant dense<0.000000e+00> : vector<8x256xf32>
    %22 = tpu.matmul %21, %19, %cst_20 {dimension_numbers = #tpu.dot_dimension_numbers<[1], [1], [0], [0], [0, 0, 1, 0], [], []>} : vector<8x12xf32>, vector<256x12xf32>, vector<8x256xf32> -> vector<8x256xf32>
    %23 = arith.addf %18, %22 : vector<8x256xf32>
    %c0_21 = arith.constant 0 : index
    %c0_22 = arith.constant 0 : index
    %24 = vector.load %arg4[%c0_21, %c0_22] : memref<8x1xf32, #tpu.memory_space<vmem>>, vector<8x1xf32>
    %25 = vector.broadcast %24 : vector<8x1xf32> to vector<8x256xf32>
    %26 = arith.addf %23, %25 : vector<8x256xf32>
    %cst_23 = arith.constant 0.000000e+00 : f32
    %27 = vector.broadcast %cst_23 : f32 to vector<8x256xf32>
    %28 = arith.cmpf oge, %26, %27 : vector<8x256xf32>
    %cst_24 = arith.constant 0.00999999977 : f32
    %29 = vector.broadcast %cst_24 : f32 to vector<8x256xf32>
    %30 = arith.mulf %29, %26 : vector<8x256xf32>
    %31 = arith.select %28, %26, %30 : vector<8x256xi1>, vector<8x256xf32>
    %cst_25 = arith.constant dense<0.000000e+00> : vector<8xf32>
    %32 = vector.multi_reduction <add>, %31, %cst_25 [1] : vector<8x256xf32> to vector<8xf32>
    %33 = vector.shape_cast %32 : vector<8xf32> to vector<8x1xf32>
    %c0_26 = arith.constant 0 : index
    %c0_27 = arith.constant 0 : index
    %c0_28 = arith.constant 0 : index
    %34 = vector.load %arg6[%c0_26, %c0_27, %c0_28] : memref<1x8x2xf32, #tpu.memory_space<vmem>>, vector<1x8x1xf32>
    %35 = vector.shape_cast %34 : vector<1x8x1xf32> to vector<8x1xf32>
    %36 = vector.shape_cast %33 : vector<8x1xf32> to vector<1x8x1xf32>
    tpu.vector_store %arg6[%c0_26, %c0_27, %c0_28], %36 {strides = array<i32>} : memref<1x8x2xf32, #tpu.memory_space<vmem>>, vector<1x8x1xf32>,
    %37 = arith.mulf %31, %31 : vector<8x256xf32>
    %cst_29 = arith.constant dense<0.000000e+00> : vector<8xf32>
    %38 = vector.multi_reduction <add>, %37, %cst_29 [1] : vector<8x256xf32> to vector<8xf32>
    %39 = vector.shape_cast %38 : vector<8xf32> to vector<8x1xf32>
    %c0_30 = arith.constant 0 : index
    %c0_31 = arith.constant 0 : index
    %c1_32 = arith.constant 1 : index
    %40 = vector.load %arg6[%c0_30, %c0_31, %c1_32] : memref<1x8x2xf32, #tpu.memory_space<vmem>>, vector<1x8x1xf32>
    %41 = vector.shape_cast %40 : vector<1x8x1xf32> to vector<8x1xf32>
    %42 = vector.shape_cast %39 : vector<8x1xf32> to vector<1x8x1xf32>
    tpu.vector_store %arg6[%c0_30, %c0_31, %c1_32], %42 {strides = array<i32>} : memref<1x8x2xf32, #tpu.memory_space<vmem>>, vector<1x8x1xf32>,
    %c0_33 = arith.constant 0 : index
    %c0_34 = arith.constant 0 : index
    %c0_35 = arith.constant 0 : index
    %43 = vector.load %arg5[%c0_33, %c0_34, %c0_35] : memref<1x8x256xf32, #tpu.memory_space<vmem>>, vector<1x8x256xf32>
    %44 = vector.shape_cast %43 : vector<1x8x256xf32> to vector<8x256xf32>
    %45 = vector.shape_cast %31 : vector<8x256xf32> to vector<1x8x256xf32>
    tpu.vector_store %arg5[%c0_33, %c0_34, %c0_35], %45 {strides = array<i32>} : memref<1x8x256xf32, #tpu.memory_space<vmem>>, vector<1x8x256xf32>,
    return
  }
  func.func @transform_0(%arg0: i32, %arg1: i32) -> (i32, i32, i32, i32) {
    %c0_i32 = arith.constant 0 : i32
    %c0_i32_0 = arith.constant 0 : i32
    %c0_i32_1 = arith.constant 0 : i32
    %c0_i32_2 = arith.constant 0 : i32
    return %arg0, %c0_i32, %c0_i32_0, %c0_i32_1 : i32, i32, i32, i32
  }
  func.func @transform_1(%arg0: i32, %arg1: i32) -> (i32, i32, i32) {
    %c0_i32 = arith.constant 0 : i32
    %c0_i32_0 = arith.constant 0 : i32
    %c0_i32_1 = arith.constant 0 : i32
    return %c0_i32, %arg1, %c0_i32_0 : i32, i32, i32
  }
  func.func @transform_2(%arg0: i32, %arg1: i32) -> (i32, i32) {
    %c0_i32 = arith.constant 0 : i32
    %c0_i32_0 = arith.constant 0 : i32
    return %arg1, %c0_i32 : i32, i32
  }
  func.func @transform_3(%arg0: i32, %arg1: i32) -> (i32, i32, i32) {
    %c0_i32 = arith.constant 0 : i32
    %c0_i32_0 = arith.constant 0 : i32
    return %arg0, %arg1, %c0_i32 : i32, i32, i32
  }
  func.func @transform_4(%arg0: i32, %arg1: i32) -> (i32, i32, i32) {
    %c0_i32 = arith.constant 0 : i32
    %c0_i32_0 = arith.constant 0 : i32
    return %arg0, %arg1, %c0_i32 : i32, i32, i32
  }
}

</mosaic_0001>

<llo_original>
// kernel: msunet_conv_block.3
$region0: #{msunet_conv_block.3}
  #allocation0 [shape = 'u32[]', space=smem, size = 0x4, offset = 0x4, fixed_abs, tag = 'smem constant byte address 0x4 - core index']
  #allocation1 [shape = 'u32[144,128]{1,0:T(1,128)}', space=vmem, size = 0x12000, scoped, tag = 'internal scratch']
  %s0 = inlined_call_operand.vmem [shape: f32[2,8,256], index: 0, kind: input, shape index: {}, may-alias: {0,3}]
  %s1 = inlined_call_operand.vmem [shape: f32[8,1], index: 1, kind: input, shape index: {}]
  %s2 = inlined_call_operand.vmem [shape: f32[8,1], index: 2, kind: input, shape index: {}]
  %s3 = inlined_call_operand.vmem [shape: f32[2,8,256], index: 3, kind: output, shape index: {}, may-alias: {0,3}]
  %s4 = sld [smem:[#allocation0]]
  $region45: #{msunet_conv_block.3} parent=0
    _
  %s6 = ssub.s32 1, %s4
  %s7 = scalar_select 0, %s6, %s4
  loop: start=0, step=1, limit=4
  $region2: #{msunet_conv_block.3} parent=0 // loop_pre_header
    _
  $region3: #{msunet_conv_block.3} parent=0 // loop_header
    %s9 = sphi 0, %s13
    %p10 = scmp.ge.s32.totalorder %s9, 4
    %s16 = sphi 0, %s28
    %s17 = sphi 0, %s24
    %s18 = sphi 0, %s16
    %s19 = sphi 0, %s17
    %s20 = sphi 0, %s18
    %s21 = sphi 0, %s19
    %s33 = sphi 0, %s35
    %s36 = sphi 0, %s33
    %s37 = sphi 0, %s36
    %s53 = sphi 0, %s37
    %s57 = sphi 0, %s57
    %s59 = sphi 0, %s57
    %s60 = sphi 0, %s59
    %s74 = sphi 0, %s60
    %s78 = sphi 0, %s78
    %s80 = sphi 0, %s78
    %s81 = sphi 0, %s80
    %s95 = sphi 0, %s81
    %s103 = sphi 0, %s105
    %s106 = sphi 0, %s103
    %s107 = sphi 0, %s106
    %s123 = sphi 0, %s107
  $region4: #{msunet_conv_block.3} parent=0 // loop_header_branch
    %12 = sbr.rel (%p10) target = $region8
  $region5: #{msunet_conv_block.3} parent=0 // loop_body
    %s14 = ssub.s32 %s9, 1
    %s15 = ssub.s32 %s9, 2
    %s22 = sadd.s32 1, %s17
    %p23 = scmp.ge.s32.totalorder %s22, 1
    %s24 = scalar_select %p23, 0, %s22
    %s25 = sadd.s32 1, %s16
    %s26 = scalar_select %p23, %s25, %s16
    %p27 = scmp.ge.s32.totalorder %s26, 2
    %s28 = scalar_select %p27, 0, %s26
    %s29 = ssub.s32 %s16, %s28
    %s30 = ssub.s32 %s17, %s24
    %s31 = sor.u32 %s29, %s30
    %p32 = scmp.eq.s32.totalorder %s31, 0
    %s34 = sadd.s32 %s33, 1
    %s35 = scalar_select %p32, %s33, %s34
    %p38 = pneg %p32
    %p39 = scmp.eq.s32.totalorder %s9, 1
    %p40 = por %p38, %p39
    %p41 = scmp.ne.s32.totalorder %s33, %s36
    %p42 = scmp.eq.s32.totalorder %s9, 0
    %p43 = por %p41, %p42
    %p44 = scmp.ne.s32.totalorder %s33, %s36
    %p45 = scmp.eq.s32.totalorder %s14, 1
    %p46 = por %p44, %p45
    %p47 = scmp.ne.s32.totalorder %s36, %s37
    %p48 = scmp.eq.s32.totalorder %s14, 0
    %p49 = por %p47, %p48
    %p50 = scmp.ne.s32.totalorder %s36, %s37
    %p51 = scmp.eq.s32.totalorder %s15, 1
    %p52 = por %p50, %p51
    %p54 = scmp.ne.s32.totalorder %s37, %s53
    %p55 = scmp.eq.s32.totalorder %s15, 0
    %p56 = por %p54, %p55
    %s58 = sadd.s32 %s57, 1
    %p61 = scmp.eq.s32.totalorder %s9, 1
    %p62 = scmp.ne.s32.totalorder %s57, %s59
    %p63 = scmp.eq.s32.totalorder %s9, 0
    %p64 = por %p62, %p63
    %p65 = scmp.ne.s32.totalorder %s57, %s59
    %p66 = scmp.eq.s32.totalorder %s14, 1
    %p67 = por %p65, %p66
    %p68 = scmp.ne.s32.totalorder %s59, %s60
    %p69 = scmp.eq.s32.totalorder %s14, 0
    %p70 = por %p68, %p69
    %p71 = scmp.ne.s32.totalorder %s59, %s60
    %p72 = scmp.eq.s32.totalorder %s15, 1
    %p73 = por %p71, %p72
    %p75 = scmp.ne.s32.totalorder %s60, %s74
    %p76 = scmp.eq.s32.totalorder %s15, 0
    %p77 = por %p75, %p76
    %s79 = sadd.s32 %s78, 1
    %p82 = scmp.eq.s32.totalorder %s9, 1
    %p83 = scmp.ne.s32.totalorder %s78, %s80
    %p84 = scmp.eq.s32.totalorder %s9, 0
    %p85 = por %p83, %p84
    %p86 = scmp.ne.s32.totalorder %s78, %s80
    %p87 = scmp.eq.s32.totalorder %s14, 1
    %p88 = por %p86, %p87
    %p89 = scmp.ne.s32.totalorder %s80, %s81
    %p90 = scmp.eq.s32.totalorder %s14, 0
    %p91 = por %p89, %p90
    %p92 = scmp.ne.s32.totalorder %s80, %s81
    %p93 = scmp.eq.s32.totalorder %s15, 1
    %p94 = por %p92, %p93
    %p96 = scmp.ne.s32.totalorder %s81, %s95
    %p97 = scmp.eq.s32.totalorder %s15, 0
    %p98 = por %p96, %p97
    %s99 = ssub.s32 %s16, %s28
    %s100 = ssub.s32 %s17, %s24
    %s101 = sor.u32 %s99, %s100
    %p102 = scmp.eq.s32.totalorder %s101, 0
    %s104 = sadd.s32 %s103, 1
    %s105 = scalar_select %p102, %s103, %s104
    %p108 = pneg %p102
    %p109 = scmp.eq.s32.totalorder %s9, 1
    %p110 = por %p108, %p109
    %p111 = scmp.ne.s32.totalorder %s103, %s106
    %p112 = scmp.eq.s32.totalorder %s9, 0
    %p113 = por %p111, %p112
    %p114 = scmp.ne.s32.totalorder %s103, %s106
    %p115 = scmp.eq.s32.totalorder %s14, 1
    %p116 = por %p114, %p115
    %p117 = scmp.ne.s32.totalorder %s106, %s107
    %p118 = scmp.eq.s32.totalorder %s14, 0
    %p119 = por %p117, %p118
    %p120 = scmp.ne.s32.totalorder %s106, %s107
    %p121 = scmp.eq.s32.totalorder %s15, 1
    %p122 = por %p120, %p121
    %p124 = scmp.ne.s32.totalorder %s107, %s123
    %p125 = scmp.eq.s32.totalorder %s15, 0
    %p126 = por %p124, %p125
    %p127 = scmp.le.s32.totalorder 1, %s9
    %p128 = scmp.lt.s32.totalorder %s9, 3
    %p129 = pnand %p127, %p128
    %p130 = pneg %p129
    // Predicated region
    $region9: #{msunet_conv_block.3} parent=5 // pred_check
      _
    $region10: #{msunet_conv_block.3} parent=5 // pred_check_branch
      %132 = sbr.rel (%p129) target = $region12
    $region11: #{msunet_conv_block.3} parent=5 // pred_region
      %s133 = ssub.s32 %s9, 1
      // Predicated region
      $region13: #{msunet_conv_block.3} parent=11 // pred_check
        %p134 = pneg %p70
      $region14: #{msunet_conv_block.3} parent=11 // pred_check_branch
        %136 = sbr.rel (%p134) target = $region16
      $region15: #{msunet_conv_block.3} parent=11 // pred_region
        _
      $region16: #{msunet_conv_block.3} parent=11 // pred_fallthru
        _
      // Predicated region
      $region17: #{msunet_conv_block.3} parent=11 // pred_check
        %p137 = pneg %p91
      $region18: #{msunet_conv_block.3} parent=11 // pred_check_branch
        %139 = sbr.rel (%p137) target = $region20
      $region19: #{msunet_conv_block.3} parent=11 // pred_region
        _
      $region20: #{msunet_conv_block.3} parent=11 // pred_fallthru
        _
    $region12: #{msunet_conv_block.3} parent=5 // pred_fallthru
      _
    %p140 = scmp.lt.s32.totalorder %s9, 2
    // Predicated region
    $region21: #{msunet_conv_block.3} parent=5 // pred_check
      %p141 = pneg %p140
    $region22: #{msunet_conv_block.3} parent=5 // pred_check_branch
      %143 = sbr.rel (%p141) target = $region24
    $region23: #{msunet_conv_block.3} parent=5 // pred_region
      // Predicated region
      $region25: #{msunet_conv_block.3} parent=23 // pred_check
        %p144 = pneg %p43
      $region26: #{msunet_conv_block.3} parent=23 // pred_check_branch
        %146 = sbr.rel (%p144) target = $region28
      $region27: #{msunet_conv_block.3} parent=23 // pred_region
        %s147 = smul.u32 2, %s17
        %p148 = scmp.lt.s32.totalorder %s16, 1
        %s149 = scalar_select %p148, %s16, 1
        %p150 = scmp.lt.s32.totalorder %s147, 1
        %s151 = scalar_select %p150, %s147, 1
        %s152 = smul.addr %s149, 2
        %s153 = sadd.s32 %s151, %s152
        %s154 = smul.addr %s153, 8
        %s155 = scalar_lea.vmem %s0, %s154
        %s156 = smul.u32 2, %s17
      $region28: #{msunet_conv_block.3} parent=23 // pred_fallthru
        _
    $region24: #{msunet_conv_block.3} parent=5 // pred_fallthru
      _
    %p157 = scmp.le.s32.totalorder 1, %s9
    %p158 = scmp.lt.s32.totalorder %s9, 3
    %p159 = pnand %p157, %p158
    %p160 = pneg %p159
    // Predicated region
    $region29: #{msunet_conv_block.3} parent=5 // pred_check
      _
    $region30: #{msunet_conv_block.3} parent=5 // pred_check_branch
      %162 = sbr.rel (%p159) target = $region32
    $region31: #{msunet_conv_block.3} parent=5 // pred_region
      %s163 = ssub.s32 %s9, 1
      %s164 = smul.u32 2, %s19
      %p165 = scmp.lt.s32.totalorder %s18, 1
      %s166 = scalar_select %p165, %s18, 1
      %p167 = scmp.lt.s32.totalorder %s164, 1
      %s168 = scalar_select %p167, %s164, 1
      %s169 = smul.addr %s166, 2
      %s170 = sadd.s32 %s168, %s169
      %s171 = smul.addr %s170, 8
      %s172 = scalar_lea.vmem %s0, %s171
      %p173 = pneg %p49
      %p174 = pneg %p46
      %p175 = pneg %p70
      %p176 = pneg %p67
      %p177 = pneg %p91
      %p178 = pneg %p88
      %p179 = pneg %p119
      %p180 = pneg %p116
      %s181 = smul.u32 2, %s19
      %p182 = scmp.lt.s32.totalorder %s18, 1
      %s183 = scalar_select %p182, %s18, 1
      %p184 = scmp.lt.s32.totalorder %s181, 1
      %s185 = scalar_select %p184, %s181, 1
      %s186 = smul.addr %s183, 2
      %s187 = sadd.s32 %s185, %s186
      %s188 = smul.addr %s187, 8
      %s189 = scalar_lea.vmem %s3, %s188
      %s190 = smul.u32 2, %s19
      %p191 = scmp.lt.s32.totalorder %s18, 1
      %s192 = scalar_select %p191, %s18, 1
      %p193 = scmp.lt.s32.totalorder %s190, 1
      %s194 = scalar_select %p193, %s190, 1
      %s195 = smul.addr %s192, 2
      %s196 = sadd.s32 %s194, %s195
      %s197 = smul.addr %s196, 8
      %s198 = scalar_lea.vmem %s0, %s197
      %s199 = smul.u32 2, %s19
      %s200 = smul.u32 2, %s19
      %p201 = scmp.lt.s32.totalorder %s18, 1
      %s202 = scalar_select %p201, %s18, 1
      %p203 = scmp.lt.s32.totalorder %s200, 1
      %s204 = scalar_select %p203, %s200, 1
      %s205 = smul.addr %s202, 2
      %s206 = sadd.s32 %s204, %s205
      %s207 = smul.addr %s206, 8
      %s208 = scalar_lea.vmem %s3, %s207
      %s209 = smul.u32 2, %s19
      %v210 = vld [vmem:[%s198] sm:$0xff]
      %v211 = vld [vmem:[%s198 + $0x8] sm:$0xff]
      %v212 = vld [vmem:[%s1] sm:$0xff]
      %214 = vset.pattern.permute.xlu0 0
      %215 = vperm.xlu0 %214, %v212
      %v216 = vpop.permute.xlu0 %215
      %v218 = vmul.f32 %v210, %v216
      %v219 = vmul.f32 %v211, %v216
      %v220 = vld [vmem:[%s2] sm:$0xff]
      %222 = vset.pattern.permute.xlu0 0
      %223 = vperm.xlu0 %222, %v220
      %v224 = vpop.permute.xlu0 %223
      %v226 = vadd.f32 %v218, %v224
      %v227 = vadd.f32 %v219, %v224
      %228 = vst [vmem:[%s208] sm:$0xff] %v226
      %229 = vst [vmem:[%s208 + $0x8] sm:$0xff] %v227
      %s230 = smul.u32 2, %s19
      %p231 = scmp.lt.s32.totalorder %s18, 1
      %s232 = scalar_select %p231, %s18, 1
      %p233 = scmp.lt.s32.totalorder %s230, 1
      %s234 = scalar_select %p233, %s230, 1
      %s235 = smul.addr %s232, 2
      %s236 = sadd.s32 %s234, %s235
      %s237 = smul.addr %s236, 8
      %s238 = scalar_lea.vmem %s3, %s237
      // Predicated region
      $region33: #{msunet_conv_block.3} parent=31 // pred_check
        %p239 = pneg %p116
      $region34: #{msunet_conv_block.3} parent=31 // pred_check_branch
        %241 = sbr.rel (%p239) target = $region36
      $region35: #{msunet_conv_block.3} parent=31 // pred_region
        %s242 = smul.u32 2, %s19
      $region36: #{msunet_conv_block.3} parent=31 // pred_fallthru
        _
    $region32: #{msunet_conv_block.3} parent=5 // pred_fallthru
      _
    %p243 = scmp.le.s32.totalorder 2, %s9
    // Predicated region
    $region37: #{msunet_conv_block.3} parent=5 // pred_check
      %p244 = pneg %p243
    $region38: #{msunet_conv_block.3} parent=5 // pred_check_branch
      %246 = sbr.rel (%p244) target = $region40
    $region39: #{msunet_conv_block.3} parent=5 // pred_region
      %s247 = ssub.s32 %s9, 2
      // Predicated region
      $region41: #{msunet_conv_block.3} parent=39 // pred_check
        %p248 = pneg %p122
      $region42: #{msunet_conv_block.3} parent=39 // pred_check_branch
        %250 = sbr.rel (%p248) target = $region44
      $region43: #{msunet_conv_block.3} parent=39 // pred_region
        %s251 = smul.u32 2, %s21
        %p252 = scmp.lt.s32.totalorder %s20, 1
        %s253 = scalar_select %p252, %s20, 1
        %p254 = scmp.lt.s32.totalorder %s251, 1
        %s255 = scalar_select %p254, %s251, 1
        %s256 = smul.addr %s253, 2
        %s257 = sadd.s32 %s255, %s256
        %s258 = smul.addr %s257, 8
        %s259 = scalar_lea.vmem %s3, %s258
      $region44: #{msunet_conv_block.3} parent=39 // pred_fallthru
        _
    $region40: #{msunet_conv_block.3} parent=5 // pred_fallthru
      _
  $region6: #{msunet_conv_block.3} parent=0 // loop_footer
    %s13 = sadd.s32 1, %s9
  $region7: #{msunet_conv_block.3} parent=0 // loop_footer_branch
    %8 = sbr.rel target = $region3
  $region8: #{msunet_conv_block.3} parent=0 // loop_exit
    _

// kernel: msunet_conv_block.2
$region0: #{msunet_conv_block.2}
  #allocation0 [shape = 'u32[]', space=smem, size = 0x4, offset = 0x4, fixed_abs, tag = 'smem constant byte address 0x4 - core index']
  #allocation1 [shape = 'u32[144,128]{1,0:T(1,128)}', space=vmem, size = 0x12000, scoped, tag = 'internal scratch']
  %s0 = inlined_call_operand.vmem [shape: f32[2,18,18,4], index: 0, kind: input, shape index: {}]
  %s1 = inlined_call_operand.vmem [shape: f32[3,8,12], index: 1, kind: input, shape index: {}]
  %s2 = inlined_call_operand.vmem [shape: f32[8,1], index: 2, kind: input, shape index: {}]
  %s3 = inlined_call_operand.vmem [shape: f32[2,8,256], index: 3, kind: output, shape index: {0}]
  %s4 = inlined_call_operand.vmem [shape: f32[2,8,2], index: 4, kind: output, shape index: {1}]
  %5 = xla_tuple %s3, %s4
  %s6 = sld [smem:[#allocation0]]
  $region53: #{msunet_conv_block.2} parent=0
    _
  %s8 = ssub.s32 1, %s6
  %s9 = scalar_select 0, %s8, %s6
  loop: start=0, step=1, limit=4
  $region2: #{msunet_conv_block.2} parent=0 // loop_pre_header
    _
  $region3: #{msunet_conv_block.2} parent=0 // loop_header
    %s11 = sphi 0, %s15
    %p12 = scmp.ge.s32.totalorder %s11, 4
    %s18 = sphi 0, %s30
    %s19 = sphi 0, %s26
    %s20 = sphi 0, %s18
    %s21 = sphi 0, %s19
    %s22 = sphi 0, %s20
    %s23 = sphi 0, %s21
    %s33 = sphi 0, %s35
    %s36 = sphi 0, %s33
    %s37 = sphi 0, %s36
    %s53 = sphi 0, %s37
    %s59 = sphi 0, %s61
    %s62 = sphi 0, %s59
    %s63 = sphi 0, %s62
    %s79 = sphi 0, %s63
    %s85 = sphi 0, %s87
    %s88 = sphi 0, %s85
    %s89 = sphi 0, %s88
    %s105 = sphi 0, %s89
    %s113 = sphi 0, %s115
    %s116 = sphi 0, %s113
    %s117 = sphi 0, %s116
    %s133 = sphi 0, %s117
    %s141 = sphi 0, %s143
    %s144 = sphi 0, %s141
    %s145 = sphi 0, %s144
    %s161 = sphi 0, %s145
  $region4: #{msunet_conv_block.2} parent=0 // loop_header_branch
    %14 = sbr.rel (%p12) target = $region8
  $region5: #{msunet_conv_block.2} parent=0 // loop_body
    %s16 = ssub.s32 %s11, 1
    %s17 = ssub.s32 %s11, 2
    %s24 = sadd.s32 1, %s19
    %p25 = scmp.ge.s32.totalorder %s24, 1
    %s26 = scalar_select %p25, 0, %s24
    %s27 = sadd.s32 1, %s18
    %s28 = scalar_select %p25, %s27, %s18
    %p29 = scmp.ge.s32.totalorder %s28, 2
    %s30 = scalar_select %p29, 0, %s28
    %s31 = ssub.s32 %s18, %s30
    %p32 = scmp.eq.s32.totalorder %s31, 0
    %s34 = sadd.s32 %s33, 1
    %s35 = scalar_select %p32, %s33, %s34
    %p38 = pneg %p32
    %p39 = scmp.eq.s32.totalorder %s11, 1
    %p40 = por %p38, %p39
    %p41 = scmp.ne.s32.totalorder %s33, %s36
    %p42 = scmp.eq.s32.totalorder %s11, 0
    %p43 = por %p41, %p42
    %p44 = scmp.ne.s32.totalorder %s33, %s36
    %p45 = scmp.eq.s32.totalorder %s16, 1
    %p46 = por %p44, %p45
    %p47 = scmp.ne.s32.totalorder %s36, %s37
    %p48 = scmp.eq.s32.totalorder %s16, 0
    %p49 = por %p47, %p48
    %p50 = scmp.ne.s32.totalorder %s36, %s37
    %p51 = scmp.eq.s32.totalorder %s17, 1
    %p52 = por %p50, %p51
    %p54 = scmp.ne.s32.totalorder %s37, %s53
    %p55 = scmp.eq.s32.totalorder %s17, 0
    %p56 = por %p54, %p55
    %s57 = ssub.s32 %s19, %s26
    %p58 = scmp.eq.s32.totalorder %s57, 0
    %s60 = sadd.s32 %s59, 1
    %s61 = scalar_select %p58, %s59, %s60
    %p64 = pneg %p58
    %p65 = scmp.eq.s32.totalorder %s11, 1
    %p66 = por %p64, %p65
    %p67 = scmp.ne.s32.totalorder %s59, %s62
    %p68 = scmp.eq.s32.totalorder %s11, 0
    %p69 = por %p67, %p68
    %p70 = scmp.ne.s32.totalorder %s59, %s62
    %p71 = scmp.eq.s32.totalorder %s16, 1
    %p72 = por %p70, %p71
    %p73 = scmp.ne.s32.totalorder %s62, %s63
    %p74 = scmp.eq.s32.totalorder %s16, 0
    %p75 = por %p73, %p74
    %p76 = scmp.ne.s32.totalorder %s62, %s63
    %p77 = scmp.eq.s32.totalorder %s17, 1
    %p78 = por %p76, %p77
    %p80 = scmp.ne.s32.totalorder %s63, %s79
    %p81 = scmp.eq.s32.totalorder %s17, 0
    %p82 = por %p80, %p81
    %s83 = ssub.s32 %s19, %s26
    %p84 = scmp.eq.s32.totalorder %s83, 0
    %s86 = sadd.s32 %s85, 1
    %s87 = scalar_select %p84, %s85, %s86
    %p90 = pneg %p84
    %p91 = scmp.eq.s32.totalorder %s11, 1
    %p92 = por %p90, %p91
    %p93 = scmp.ne.s32.totalorder %s85, %s88
    %p94 = scmp.eq.s32.totalorder %s11, 0
    %p95 = por %p93, %p94
    %p96 = scmp.ne.s32.totalorder %s85, %s88
    %p97 = scmp.eq.s32.totalorder %s16, 1
    %p98 = por %p96, %p97
    %p99 = scmp.ne.s32.totalorder %s88, %s89
    %p100 = scmp.eq.s32.totalorder %s16, 0
    %p101 = por %p99, %p100
    %p102 = scmp.ne.s32.totalorder %s88, %s89
    %p103 = scmp.eq.s32.totalorder %s17, 1
    %p104 = por %p102, %p103
    %p106 = scmp.ne.s32.totalorder %s89, %s105
    %p107 = scmp.eq.s32.totalorder %s17, 0
    %p108 = por %p106, %p107
    %s109 = ssub.s32 %s18, %s30
    %s110 = ssub.s32 %s19, %s26
    %s111 = sor.u32 %s109, %s110
    %p112 = scmp.eq.s32.totalorder %s111, 0
    %s114 = sadd.s32 %s113, 1
    %s115 = scalar_select %p112, %s113, %s114
    %p118 = pneg %p112
    %p119 = scmp.eq.s32.totalorder %s11, 1
    %p120 = por %p118, %p119
    %p121 = scmp.ne.s32.totalorder %s113, %s116
    %p122 = scmp.eq.s32.totalorder %s11, 0
    %p123 = por %p121, %p122
    %p124 = scmp.ne.s32.totalorder %s113, %s116
    %p125 = scmp.eq.s32.totalorder %s16, 1
    %p126 = por %p124, %p125
    %p127 = scmp.ne.s32.totalorder %s116, %s117
    %p128 = scmp.eq.s32.totalorder %s16, 0
    %p129 = por %p127, %p128
    %p130 = scmp.ne.s32.totalorder %s116, %s117
    %p131 = scmp.eq.s32.totalorder %s17, 1
    %p132 = por %p130, %p131
    %p134 = scmp.ne.s32.totalorder %s117, %s133
    %p135 = scmp.eq.s32.totalorder %s17, 0
    %p136 = por %p134, %p135
    %s137 = ssub.s32 %s18, %s30
    %s138 = ssub.s32 %s19, %s26
    %s139 = sor.u32 %s137, %s138
    %p140 = scmp.eq.s32.totalorder %s139, 0
    %s142 = sadd.s32 %s141, 1
    %s143 = scalar_select %p140, %s141, %s142
    %p146 = pneg %p140
    %p147 = scmp.eq.s32.totalorder %s11, 1
    %p148 = por %p146, %p147
    %p149 = scmp.ne.s32.totalorder %s141, %s144
    %p150 = scmp.eq.s32.totalorder %s11, 0
    %p151 = por %p149, %p150
    %p152 = scmp.ne.s32.totalorder %s141, %s144
    %p153 = scmp.eq.s32.totalorder %s16, 1
    %p154 = por %p152, %p153
    %p155 = scmp.ne.s32.totalorder %s144, %s145
    %p156 = scmp.eq.s32.totalorder %s16, 0
    %p157 = por %p155, %p156
    %p158 = scmp.ne.s32.totalorder %s144, %s145
    %p159 = scmp.eq.s32.totalorder %s17, 1
    %p160 = por %p158, %p159
    %p162 = scmp.ne.s32.totalorder %s145, %s161
    %p163 = scmp.eq.s32.totalorder %s17, 0
    %p164 = por %p162, %p163
    %p165 = scmp.le.s32.totalorder 1, %s11
    %p166 = scmp.lt.s32.totalorder %s11, 3
    %p167 = pnand %p165, %p166
    %p168 = pneg %p167
    // Predicated region
    $region9: #{msunet_conv_block.2} parent=5 // pred_check
      _
    $region10: #{msunet_conv_block.2} parent=5 // pred_check_branch
      %170 = sbr.rel (%p167) target = $region12
    $region11: #{msunet_conv_block.2} parent=5 // pred_region
      %s171 = ssub.s32 %s11, 1
      // Predicated region
      $region13: #{msunet_conv_block.2} parent=11 // pred_check
        %p172 = pneg %p75
      $region14: #{msunet_conv_block.2} parent=11 // pred_check_branch
        %174 = sbr.rel (%p172) target = $region16
      $region15: #{msunet_conv_block.2} parent=11 // pred_region
        %p175 = scmp.lt.s32.totalorder %s21, 0
        %s176 = scalar_select %p175, %s21, 0
        %s177 = smul.addr %s176, 8
        %s178 = scalar_lea.vmem %s1, %s177
      $region16: #{msunet_conv_block.2} parent=11 // pred_fallthru
        _
      // Predicated region
      $region17: #{msunet_conv_block.2} parent=11 // pred_check
        %p179 = pneg %p101
      $region18: #{msunet_conv_block.2} parent=11 // pred_check_branch
        %181 = sbr.rel (%p179) target = $region20
      $region19: #{msunet_conv_block.2} parent=11 // pred_region
        %p182 = scmp.lt.s32.totalorder %s21, 0
        %s183 = scalar_select %p182, %s21, 0
        %s184 = smul.addr %s183, 8
        %s185 = scalar_lea.vmem %s2, %s184
      $region20: #{msunet_conv_block.2} parent=11 // pred_fallthru
        _
    $region12: #{msunet_conv_block.2} parent=5 // pred_fallthru
      _
    %p186 = scmp.lt.s32.totalorder %s11, 2
    // Predicated region
    $region21: #{msunet_conv_block.2} parent=5 // pred_check
      %p187 = pneg %p186
    $region22: #{msunet_conv_block.2} parent=5 // pred_check_branch
      %189 = sbr.rel (%p187) target = $region24
    $region23: #{msunet_conv_block.2} parent=5 // pred_region
      // Predicated region
      $region25: #{msunet_conv_block.2} parent=23 // pred_check
        %p190 = pneg %p43
      $region26: #{msunet_conv_block.2} parent=23 // pred_check_branch
        %192 = sbr.rel (%p190) target = $region28
      $region27: #{msunet_conv_block.2} parent=23 // pred_region
        %p193 = scmp.lt.s32.totalorder %s18, 1
        %s194 = scalar_select %p193, %s18, 1
        %s195 = smul.addr %s194, 54
        %s196 = smul.addr %s195, 8
        %s197 = scalar_lea.vmem %s0, %s196
      $region28: #{msunet_conv_block.2} parent=23 // pred_fallthru
        _
    $region24: #{msunet_conv_block.2} parent=5 // pred_fallthru
      _
    %p198 = scmp.le.s32.totalorder 1, %s11
    %p199 = scmp.lt.s32.totalorder %s11, 3
    %p200 = pnand %p198, %p199
    %p201 = pneg %p200
    // Predicated region
    $region29: #{msunet_conv_block.2} parent=5 // pred_check
      _
    $region30: #{msunet_conv_block.2} parent=5 // pred_check_branch
      %203 = sbr.rel (%p200) target = $region32
    $region31: #{msunet_conv_block.2} parent=5 // pred_region
      %s204 = ssub.s32 %s11, 1
      %p205 = scmp.lt.s32.totalorder %s20, 1
      %s206 = scalar_select %p205, %s20, 1
      %s207 = smul.addr %s206, 54
      %s208 = smul.addr %s207, 8
      %s209 = scalar_lea.vmem %s0, %s208
      %p210 = pneg %p49
      %p211 = pneg %p46
      %p212 = scmp.lt.s32.totalorder %s21, 0
      %s213 = scalar_select %p212, %s21, 0
      %s214 = smul.addr %s213, 8
      %s215 = scalar_lea.vmem %s1, %s214
      %p216 = pneg %p75
      %p217 = pneg %p72
      %p218 = scmp.lt.s32.totalorder %s21, 0
      %s219 = scalar_select %p218, %s21, 0
      %s220 = smul.addr %s219, 8
      %s221 = scalar_lea.vmem %s2, %s220
      %p222 = pneg %p101
      %p223 = pneg %p98
      %p224 = pneg %p129
      %p225 = pneg %p126
      %p226 = scmp.lt.s32.totalorder %s20, 1
      %s227 = scalar_select %p226, %s20, 1
      %p228 = scmp.lt.s32.totalorder %s21, 0
      %s229 = scalar_select %p228, %s21, 0
      %s230 = smul.addr %s229, 2
      %s231 = smul.addr %s227, 2
      %s232 = sadd.s32 %s230, %s231
      %s233 = smul.addr %s232, 8
      %s234 = scalar_lea.vmem %s3, %s233
      %p235 = pneg %p157
      %p236 = pneg %p154
      %p237 = scmp.lt.s32.totalorder %s20, 1
      %s238 = scalar_select %p237, %s20, 1
      %p239 = scmp.lt.s32.totalorder %s21, 0
      %s240 = scalar_select %p239, %s21, 0
      %s241 = sadd.s32 %s240, %s238
      %s242 = smul.addr %s241, 8
      %s243 = scalar_lea.vmem %s4, %s242
      %p244 = scmp.lt.s32.totalorder %s20, 1
      %s245 = scalar_select %p244, %s20, 1
      %s246 = smul.addr %s245, 54
      %s247 = smul.addr %s246, 8
      %s248 = scalar_lea.vmem %s0, %s247
      %p249 = scmp.lt.s32.totalorder %s21, 0
      %s250 = scalar_select %p249, %s21, 0
      %s251 = smul.addr %s250, 8
      %s252 = scalar_lea.vmem %s1, %s251
      %p253 = scmp.lt.s32.totalorder %s21, 0
      %s254 = scalar_select %p253, %s21, 0
      %s255 = smul.addr %s254, 8
      %s256 = scalar_lea.vmem %s2, %s255
      %p257 = scmp.lt.s32.totalorder %s20, 1
      %s258 = scalar_select %p257, %s20, 1
      %p259 = scmp.lt.s32.totalorder %s21, 0
      %s260 = scalar_select %p259, %s21, 0
      %s261 = smul.addr %s260, 2
      %s262 = smul.addr %s258, 2
      %s263 = sadd.s32 %s261, %s262
      %s264 = smul.addr %s263, 8
      %s265 = scalar_lea.vmem %s3, %s264
      %p266 = scmp.lt.s32.totalorder %s20, 1
      %s267 = scalar_select %p266, %s20, 1
      %p268 = scmp.lt.s32.totalorder %s21, 0
      %s269 = scalar_select %p268, %s21, 0
      %s270 = sadd.s32 %s269, %s267
      %s271 = smul.addr %s270, 8
      %s272 = scalar_lea.vmem %s4, %s271
      %v273 = vld [vmem:[%s248] sm:$0xff]
      %v274 = vld [vmem:[%s248 + $0x8] sm:$0xff]
      %v275 = vld [vmem:[%s248 + $0x18] sm:$0xff]
      %v276 = vld [vmem:[%s248 + $0x20] sm:$0xff]
      %v277 = vld [vmem:[%s248 + $0x30] sm:$0xff]
      %v278 = vld [vmem:[%s248 + $0x38] sm:$0xff]
      %v279 = vld [vmem:[%s248 + $0x48] sm:$0xff]
      %v280 = vld [vmem:[%s248 + $0x50] sm:$0xff]
      %v281 = vld [vmem:[%s248 + $0x60] sm:$0xff]
      %v282 = vld [vmem:[%s248 + $0x68] sm:$0xff]
      %v283 = vld [vmem:[%s248 + $0x78] sm:$0xff]
      %v284 = vld [vmem:[%s248 + $0x80] sm:$0xff]
      %v285 = vld [vmem:[%s248 + $0x90] sm:$0xff]
      %v286 = vld [vmem:[%s248 + $0x98] sm:$0xff]
      %v287 = vld [vmem:[%s248 + $0xa8] sm:$0xff]
      %v288 = vld [vmem:[%s248 + $0xb0] sm:$0xff]
      %v289 = vld [vmem:[%s248 + $0xc0] sm:$0xff]
      %v290 = vld [vmem:[%s248 + $0xc8] sm:$0xff]
      %v291 = vld [vmem:[%s248 + $0xd8] sm:$0xff]
      %v292 = vld [vmem:[%s248 + $0xe0] sm:$0xff]
      %v293 = vld [vmem:[%s248 + $0xf0] sm:$0xff]
      %v294 = vld [vmem:[%s248 + $0xf8] sm:$0xff]
      %v295 = vld [vmem:[%s248 + $0x108] sm:$0xff]
      %v296 = vld [vmem:[%s248 + $0x110] sm:$0xff]
      %v297 = vld [vmem:[%s248 + $0x120] sm:$0xff]
      %v298 = vld [vmem:[%s248 + $0x128] sm:$0xff]
      %v299 = vld [vmem:[%s248 + $0x138] sm:$0xff]
      %v300 = vld [vmem:[%s248 + $0x140] sm:$0xff]
      %v301 = vld [vmem:[%s248 + $0x150] sm:$0xff]
      %v302 = vld [vmem:[%s248 + $0x158] sm:$0xff]
      %v303 = vld [vmem:[%s248 + $0x168] sm:$0xff]
      %v304 = vld [vmem:[%s248 + $0x170] sm:$0xff]
      %v305 = vld [vmem:[%s248 + $0x180] sm:$0xff]
      %v306 = vld [vmem:[%s248 + $0x188] sm:$0xff]
      %v307 = vld [vmem:[%s248 + $0x198] sm:$0xff]
      %v308 = vld [vmem:[%s248 + $0x1a0] sm:$0xff]
      %v309 = vld [vmem:[%s248 + $0x1] sm:$0xff]
      %v310 = vld [vmem:[%s248 + $0x9] sm:$0xff]
      %v311 = vld [vmem:[%s248 + $0x19] sm:$0xff]
      %v312 = vld [vmem:[%s248 + $0x21] sm:$0xff]
      %v313 = vld [vmem:[%s248 + $0x31] sm:$0xff]
      %v314 = vld [vmem:[%s248 + $0x39] sm:$0xff]
      %v315 = vld [vmem:[%s248 + $0x49] sm:$0xff]
      %v316 = vld [vmem:[%s248 + $0x51] sm:$0xff]
      %v317 = vld [vmem:[%s248 + $0x61] sm:$0xff]
      %v318 = vld [vmem:[%s248 + $0x69] sm:$0xff]
      %v319 = vld [vmem:[%s248 + $0x79] sm:$0xff]
      %v320 = vld [vmem:[%s248 + $0x81] sm:$0xff]
      %v321 = vld [vmem:[%s248 + $0x91] sm:$0xff]
      %v322 = vld [vmem:[%s248 + $0x99] sm:$0xff]
      %v323 = vld [vmem:[%s248 + $0xa9] sm:$0xff]
      %v324 = vld [vmem:[%s248 + $0xb1] sm:$0xff]
      %v325 = vld [vmem:[%s248 + $0xc1] sm:$0xff]
      %v326 = vld [vmem:[%s248 + $0xc9] sm:$0xff]
      %v327 = vld [vmem:[%s248 + $0xd9] sm:$0xff]
      %v328 = vld [vmem:[%s248 + $0xe1] sm:$0xff]
      %v329 = vld [vmem:[%s248 + $0xf1] sm:$0xff]
      %v330 = vld [vmem:[%s248 + $0xf9] sm:$0xff]
      %v331 = vld [vmem:[%s248 + $0x109] sm:$0xff]
      %v332 = vld [vmem:[%s248 + $0x111] sm:$0xff]
      %v333 = vld [vmem:[%s248 + $0x121] sm:$0xff]
      %v334 = vld [vmem:[%s248 + $0x129] sm:$0xff]
      %v335 = vld [vmem:[%s248 + $0x139] sm:$0xff]
      %v336 = vld [vmem:[%s248 + $0x141] sm:$0xff]
      %v337 = vld [vmem:[%s248 + $0x151] sm:$0xff]
      %v338 = vld [vmem:[%s248 + $0x159] sm:$0xff]
      %v339 = vld [vmem:[%s248 + $0x169] sm:$0xff]
      %v340 = vld [vmem:[%s248 + $0x171] sm:$0xff]
      %v341 = vld [vmem:[%s248 + $0x181] sm:$0xff]
      %v342 = vld [vmem:[%s248 + $0x189] sm:$0xff]
      %v343 = vld [vmem:[%s248 + $0x199] sm:$0xff]
      %v344 = vld [vmem:[%s248 + $0x1a1] sm:$0xff]
      %v345 = vld [vmem:[%s248 + $0x2] sm:$0xff]
      %v346 = vld [vmem:[%s248 + $0xa] sm:$0xff]
      %v347 = vld [vmem:[%s248 + $0x1a] sm:$0xff]
      %v348 = vld [vmem:[%s248 + $0x22] sm:$0xff]
      %v349 = vld [vmem:[%s248 + $0x32] sm:$0xff]
      %v350 = vld [vmem:[%s248 + $0x3a] sm:$0xff]
      %v351 = vld [vmem:[%s248 + $0x4a] sm:$0xff]
      %v352 = vld [vmem:[%s248 + $0x52] sm:$0xff]
      %v353 = vld [vmem:[%s248 + $0x62] sm:$0xff]
      %v354 = vld [vmem:[%s248 + $0x6a] sm:$0xff]
      %v355 = vld [vmem:[%s248 + $0x7a] sm:$0xff]
      %v356 = vld [vmem:[%s248 + $0x82] sm:$0xff]
      %v357 = vld [vmem:[%s248 + $0x92] sm:$0xff]
      %v358 = vld [vmem:[%s248 + $0x9a] sm:$0xff]
      %v359 = vld [vmem:[%s248 + $0xaa] sm:$0xff]
      %v360 = vld [vmem:[%s248 + $0xb2] sm:$0xff]
      %v361 = vld [vmem:[%s248 + $0xc2] sm:$0xff]
      %v362 = vld [vmem:[%s248 + $0xca] sm:$0xff]
      %v363 = vld [vmem:[%s248 + $0xda] sm:$0xff]
      %v364 = vld [vmem:[%s248 + $0xe2] sm:$0xff]
      %v365 = vld [vmem:[%s248 + $0xf2] sm:$0xff]
      %v366 = vld [vmem:[%s248 + $0xfa] sm:$0xff]
      %v367 = vld [vmem:[%s248 + $0x10a] sm:$0xff]
      %v368 = vld [vmem:[%s248 + $0x112] sm:$0xff]
      %v369 = vld [vmem:[%s248 + $0x122] sm:$0xff]
      %v370 = vld [vmem:[%s248 + $0x12a] sm:$0xff]
      %v371 = vld [vmem:[%s248 + $0x13a] sm:$0xff]
      %v372 = vld [vmem:[%s248 + $0x142] sm:$0xff]
      %v373 = vld [vmem:[%s248 + $0x152] sm:$0xff]
      %v374 = vld [vmem:[%s248 + $0x15a] sm:$0xff]
      %v375 = vld [vmem:[%s248 + $0x16a] sm:$0xff]
      %v376 = vld [vmem:[%s248 + $0x172] sm:$0xff]
      %v377 = vld [vmem:[%s248 + $0x182] sm:$0xff]
      %v378 = vld [vmem:[%s248 + $0x18a] sm:$0xff]
      %v379 = vld [vmem:[%s248 + $0x19a] sm:$0xff]
      %v380 = vld [vmem:[%s248 + $0x1a2] sm:$0xff]
      %417 = vrot.lane.b32.xlu0 %v309, 4
      %v418 = vpop.permute.xlu0 %417
      %419 = vrot.lane.b32.xlu0 %v310, 4
      %v420 = vpop.permute.xlu0 %419
      %421 = vrot.lane.b32.xlu0 %v311, 4
      %v422 = vpop.permute.xlu0 %421
      %423 = vrot.lane.b32.xlu0 %v312, 4
      %v424 = vpop.permute.xlu0 %423
      %425 = vrot.lane.b32.xlu0 %v313, 4
      %v426 = vpop.permute.xlu0 %425
      %427 = vrot.lane.b32.xlu0 %v314, 4
      %v428 = vpop.permute.xlu0 %427
      %429 = vrot.lane.b32.xlu0 %v315, 4
      %v430 = vpop.permute.xlu0 %429
      %431 = vrot.lane.b32.xlu0 %v316, 4
      %v432 = vpop.permute.xlu0 %431
      %433 = vrot.lane.b32.xlu0 %v317, 4
      %v434 = vpop.permute.xlu0 %433
      %435 = vrot.lane.b32.xlu0 %v318, 4
      %v436 = vpop.permute.xlu0 %435
      %437 = vrot.lane.b32.xlu0 %v319, 4
      %v438 = vpop.permute.xlu0 %437
      %439 = vrot.lane.b32.xlu0 %v320, 4
      %v440 = vpop.permute.xlu0 %439
      %441 = vrot.lane.b32.xlu0 %v321, 4
      %v442 = vpop.permute.xlu0 %441
      %443 = vrot.lane.b32.xlu0 %v322, 4
      %v444 = vpop.permute.xlu0 %443
      %445 = vrot.lane.b32.xlu0 %v323, 4
      %v446 = vpop.permute.xlu0 %445
      %447 = vrot.lane.b32.xlu0 %v324, 4
      %v448 = vpop.permute.xlu0 %447
      %449 = vrot.lane.b32.xlu0 %v325, 4
      %v450 = vpop.permute.xlu0 %449
      %451 = vrot.lane.b32.xlu0 %v326, 4
      %v452 = vpop.permute.xlu0 %451
      %453 = vrot.lane.b32.xlu0 %v327, 4
      %v454 = vpop.permute.xlu0 %453
      %455 = vrot.lane.b32.xlu0 %v328, 4
      %v456 = vpop.permute.xlu0 %455
      %457 = vrot.lane.b32.xlu0 %v329, 4
      %v458 = vpop.permute.xlu0 %457
      %459 = vrot.lane.b32.xlu0 %v330, 4
      %v460 = vpop.permute.xlu0 %459
      %461 = vrot.lane.b32.xlu0 %v331, 4
      %v462 = vpop.permute.xlu0 %461
      %463 = vrot.lane.b32.xlu0 %v332, 4
      %v464 = vpop.permute.xlu0 %463
      %465 = vrot.lane.b32.xlu0 %v333, 4
      %v466 = vpop.permute.xlu0 %465
      %467 = vrot.lane.b32.xlu0 %v334, 4
      %v468 = vpop.permute.xlu0 %467
      %469 = vrot.lane.b32.xlu0 %v335, 4
      %v470 = vpop.permute.xlu0 %469
      %471 = vrot.lane.b32.xlu0 %v336, 4
      %v472 = vpop.permute.xlu0 %471
      %473 = vrot.lane.b32.xlu0 %v337, 4
      %v474 = vpop.permute.xlu0 %473
      %475 = vrot.lane.b32.xlu0 %v338, 4
      %v476 = vpop.permute.xlu0 %475
      %477 = vrot.lane.b32.xlu0 %v339, 4
      %v478 = vpop.permute.xlu0 %477
      %479 = vrot.lane.b32.xlu0 %v340, 4
      %v480 = vpop.permute.xlu0 %479
      %481 = vrot.lane.b32.xlu0 %v341, 4
      %v482 = vpop.permute.xlu0 %481
      %483 = vrot.lane.b32.xlu0 %v342, 4
      %v484 = vpop.permute.xlu0 %483
      %485 = vrot.lane.b32.xlu0 %v343, 4
      %v486 = vpop.permute.xlu0 %485
      %487 = vrot.lane.b32.xlu0 %v344, 4
      %v488 = vpop.permute.xlu0 %487
      %561 = vrot.lane.b32.xlu0 %v345, 8
      %v562 = vpop.permute.xlu0 %561
      %563 = vrot.lane.b32.xlu0 %v346, 8
      %v564 = vpop.permute.xlu0 %563
      %565 = vrot.lane.b32.xlu0 %v347, 8
      %v566 = vpop.permute.xlu0 %565
      %567 = vrot.lane.b32.xlu0 %v348, 8
      %v568 = vpop.permute.xlu0 %567
      %569 = vrot.lane.b32.xlu0 %v349, 8
      %v570 = vpop.permute.xlu0 %569
      %571 = vrot.lane.b32.xlu0 %v350, 8
      %v572 = vpop.permute.xlu0 %571
      %573 = vrot.lane.b32.xlu0 %v351, 8
      %v574 = vpop.permute.xlu0 %573
      %575 = vrot.lane.b32.xlu0 %v352, 8
      %v576 = vpop.permute.xlu0 %575
      %577 = vrot.lane.b32.xlu0 %v353, 8
      %v578 = vpop.permute.xlu0 %577
      %579 = vrot.lane.b32.xlu0 %v354, 8
      %v580 = vpop.permute.xlu0 %579
      %581 = vrot.lane.b32.xlu0 %v355, 8
      %v582 = vpop.permute.xlu0 %581
      %583 = vrot.lane.b32.xlu0 %v356, 8
      %v584 = vpop.permute.xlu0 %583
      %585 = vrot.lane.b32.xlu0 %v357, 8
      %v586 = vpop.permute.xlu0 %585
      %587 = vrot.lane.b32.xlu0 %v358, 8
      %v588 = vpop.permute.xlu0 %587
      %589 = vrot.lane.b32.xlu0 %v359, 8
      %v590 = vpop.permute.xlu0 %589
      %591 = vrot.lane.b32.xlu0 %v360, 8
      %v592 = vpop.permute.xlu0 %591
      %593 = vrot.lane.b32.xlu0 %v361, 8
      %v594 = vpop.permute.xlu0 %593
      %595 = vrot.lane.b32.xlu0 %v362, 8
      %v596 = vpop.permute.xlu0 %595
      %597 = vrot.lane.b32.xlu0 %v363, 8
      %v598 = vpop.permute.xlu0 %597
      %599 = vrot.lane.b32.xlu0 %v364, 8
      %v600 = vpop.permute.xlu0 %599
      %601 = vrot.lane.b32.xlu0 %v365, 8
      %v602 = vpop.permute.xlu0 %601
      %603 = vrot.lane.b32.xlu0 %v366, 8
      %v604 = vpop.permute.xlu0 %603
      %605 = vrot.lane.b32.xlu0 %v367, 8
      %v606 = vpop.permute.xlu0 %605
      %607 = vrot.lane.b32.xlu0 %v368, 8
      %v608 = vpop.permute.xlu0 %607
      %609 = vrot.lane.b32.xlu0 %v369, 8
      %v610 = vpop.permute.xlu0 %609
      %611 = vrot.lane.b32.xlu0 %v370, 8
      %v612 = vpop.permute.xlu0 %611
      %613 = vrot.lane.b32.xlu0 %v371, 8
      %v614 = vpop.permute.xlu0 %613
      %615 = vrot.lane.b32.xlu0 %v372, 8
      %v616 = vpop.permute.xlu0 %615
      %617 = vrot.lane.b32.xlu0 %v373, 8
      %v618 = vpop.permute.xlu0 %617
      %619 = vrot.lane.b32.xlu0 %v374, 8
      %v620 = vpop.permute.xlu0 %619
      %621 = vrot.lane.b32.xlu0 %v375, 8
      %v622 = vpop.permute.xlu0 %621
      %623 = vrot.lane.b32.xlu0 %v376, 8
      %v624 = vpop.permute.xlu0 %623
      %625 = vrot.lane.b32.xlu0 %v377, 8
      %v626 = vpop.permute.xlu0 %625
      %627 = vrot.lane.b32.xlu0 %v378, 8
      %v628 = vpop.permute.xlu0 %627
      %629 = vrot.lane.b32.xlu0 %v379, 8
      %v630 = vpop.permute.xlu0 %629
      %631 = vrot.lane.b32.xlu0 %v380, 8
      %v632 = vpop.permute.xlu0 %631
      %vm669 = vcmask 31744
      %v670 = vsel %vm669, %v273, %v418
      %v671 = vsel %vm669, %v274, %v420
      %v672 = vsel %vm669, %v275, %v422
      %v673 = vsel %vm669, %v276, %v424
      %v674 = vsel %vm669, %v277, %v426
      %v675 = vsel %vm669, %v278, %v428
      %v676 = vsel %vm669, %v279, %v430
      %v677 = vsel %vm669, %v280, %v432
      %v678 = vsel %vm669, %v281, %v434
      %v679 = vsel %vm669, %v282, %v436
      %v680 = vsel %vm669, %v283, %v438
      %v681 = vsel %vm669, %v284, %v440
      %v682 = vsel %vm669, %v285, %v442
      %v683 = vsel %vm669, %v286, %v444
      %v684 = vsel %vm669, %v287, %v446
      %v685 = vsel %vm669, %v288, %v448
      %v686 = vsel %vm669, %v289, %v450
      %v687 = vsel %vm669, %v290, %v452
      %v688 = vsel %vm669, %v291, %v454
      %v689 = vsel %vm669, %v292, %v456
      %v690 = vsel %vm669, %v293, %v458
      %v691 = vsel %vm669, %v294, %v460
      %v692 = vsel %vm669, %v295, %v462
      %v693 = vsel %vm669, %v296, %v464
      %v694 = vsel %vm669, %v297, %v466
      %v695 = vsel %vm669, %v298, %v468
      %v696 = vsel %vm669, %v299, %v470
      %v697 = vsel %vm669, %v300, %v472
      %v698 = vsel %vm669, %v301, %v474
      %v699 = vsel %vm669, %v302, %v476
      %v700 = vsel %vm669, %v303, %v478
      %v701 = vsel %vm669, %v304, %v480
      %v702 = vsel %vm669, %v305, %v482
      %v703 = vsel %vm669, %v306, %v484
      %v704 = vsel %vm669, %v307, %v486
      %v705 = vsel %vm669, %v308, %v488
      %vm706 = vcmask 64512
      %v707 = vsel %vm706, %v670, %v562
      %v708 = vsel %vm706, %v671, %v564
      %v709 = vsel %vm706, %v672, %v566
      %v710 = vsel %vm706, %v673, %v568
      %v711 = vsel %vm706, %v674, %v570
      %v712 = vsel %vm706, %v675, %v572
      %v713 = vsel %vm706, %v676, %v574
      %v714 = vsel %vm706, %v677, %v576
      %v715 = vsel %vm706, %v678, %v578
      %v716 = vsel %vm706, %v679, %v580
      %v717 = vsel %vm706, %v680, %v582
      %v718 = vsel %vm706, %v681, %v584
      %v719 = vsel %vm706, %v682, %v586
      %v720 = vsel %vm706, %v683, %v588
      %v721 = vsel %vm706, %v684, %v590
      %v722 = vsel %vm706, %v685, %v592
      %v723 = vsel %vm706, %v686, %v594
      %v724 = vsel %vm706, %v687, %v596
      %v725 = vsel %vm706, %v688, %v598
      %v726 = vsel %vm706, %v689, %v600
      %v727 = vsel %vm706, %v690, %v602
      %v728 = vsel %vm706, %v691, %v604
      %v729 = vsel %vm706, %v692, %v606
      %v730 = vsel %vm706, %v693, %v608
      %v731 = vsel %vm706, %v694, %v610
      %v732 = vsel %vm706, %v695, %v612
      %v733 = vsel %vm706, %v696, %v614
      %v734 = vsel %vm706, %v697, %v616
      %v735 = vsel %vm706, %v698, %v618
      %v736 = vsel %vm706, %v699, %v620
      %v737 = vsel %vm706, %v700, %v622
      %v738 = vsel %vm706, %v701, %v624
      %v739 = vsel %vm706, %v702, %v626
      %v740 = vsel %vm706, %v703, %v628
      %v741 = vsel %vm706, %v704, %v630
      %v742 = vsel %vm706, %v705, %v632
      %v743 = vld [vmem:[%s252] sm:$0xff]
      %s744 = scalar_lea.vmem %s252, 8
      %v745 = vld [vmem:[%s744] sm:$0xff]
      %vm746 = vcmask 97280
      %v748 = vsel %vm746, %v745, 0
      %v751 = vsel %vm746, %v709, 0
      %v754 = vsel %vm746, %v710, 0
      %v757 = vsel %vm746, %v711, 0
      %v760 = vsel %vm746, %v712, 0
      %v763 = vsel %vm746, %v713, 0
      %v766 = vsel %vm746, %v714, 0
      %v769 = vsel %vm746, %v715, 0
      %v772 = vsel %vm746, %v716, 0
      %v775 = vsel %vm746, %v717, 0
      %v778 = vsel %vm746, %v718, 0
      %v781 = vsel %vm746, %v719, 0
      %v784 = vsel %vm746, %v720, 0
      %v787 = vsel %vm746, %v721, 0
      %v790 = vsel %vm746, %v722, 0
      %v793 = vsel %vm746, %v723, 0
      %v796 = vsel %vm746, %v724, 0
      %v799 = vsel %vm746, %v725, 0
      %v802 = vsel %vm746, %v726, 0
      %v805 = vsel %vm746, %v727, 0
      %v808 = vsel %vm746, %v728, 0
      %v811 = vsel %vm746, %v729, 0
      %v814 = vsel %vm746, %v730, 0
      %v817 = vsel %vm746, %v731, 0
      %v820 = vsel %vm746, %v732, 0
      %v823 = vsel %vm746, %v733, 0
      %v826 = vsel %vm746, %v734, 0
      %v829 = vsel %vm746, %v735, 0
      %v832 = vsel %vm746, %v736, 0
      %v835 = vsel %vm746, %v737, 0
      %v838 = vsel %vm746, %v738, 0
      %v841 = vsel %vm746, %v739, 0
      %v844 = vsel %vm746, %v740, 0
      %846 = vmatprep.subr.mxu0 0.0
      %847 = vmatpush1.xpose.msra.mxu0 %v751
      %848 = vmatprep.subr.mxu0 0.0
      %849 = vmatpush1.xpose.msra.mxu0 %v754
      %850 = vmatprep.subr.mxu0 0.0
      %851 = vmatpush1.xpose.msra.mxu0 %v757
      %852 = vmatprep.subr.mxu0 0.0
      %853 = vmatpush1.xpose.msra.mxu0 %v760
      %854 = vmatprep.subr.mxu0 0.0
      %855 = vmatpush1.xpose.msra.mxu0 %v763
      %856 = vmatprep.subr.mxu0 0.0
      %857 = vmatpush1.xpose.msra.mxu0 %v766
      %858 = vmatprep.subr.mxu0 0.0
      %859 = vmatpush1.xpose.msra.mxu0 %v769
      %860 = vmatprep.subr.mxu0 0.0
      %861 = vmatpush1.xpose.msra.mxu0 %v772
      %862 = vmatprep.subr.mxu0 0.0
      %863 = vmatpush1.xpose.msra.mxu0 %v775
      %864 = vmatprep.subr.mxu0 0.0
      %865 = vmatpush1.xpose.msra.mxu0 %v778
      %866 = vmatprep.subr.mxu0 0.0
      %867 = vmatpush1.xpose.msra.mxu0 %v781
      %868 = vmatprep.subr.mxu0 0.0
      %869 = vmatpush1.xpose.msra.mxu0 %v784
      %870 = vmatprep.subr.mxu0 0.0
      %871 = vmatpush1.xpose.msra.mxu0 %v787
      %872 = vmatprep.subr.mxu0 0.0
      %873 = vmatpush1.xpose.msra.mxu0 %v790
      %874 = vmatprep.subr.mxu0 0.0
      %875 = vmatpush1.xpose.msra.mxu0 %v793
      %876 = vmatprep.subr.mxu0 0.0
      %877 = vmatpush1.xpose.msra.mxu0 %v796
      %878 = vmatprep.subr.mxu0 0.0
      %879 = vmatpush1.xpose.msra.mxu0 %v799
      %880 = vmatprep.subr.mxu0 0.0
      %881 = vmatpush1.xpose.msra.mxu0 %v802
      %882 = vmatprep.subr.mxu0 0.0
      %883 = vmatpush1.xpose.msra.mxu0 %v805
      %884 = vmatprep.subr.mxu0 0.0
      %885 = vmatpush1.xpose.msra.mxu0 %v808
      %886 = vmatprep.subr.mxu0 0.0
      %887 = vmatpush1.xpose.msra.mxu0 %v811
      %888 = vmatprep.subr.mxu0 0.0
      %889 = vmatpush1.xpose.msra.mxu0 %v814
      %890 = vmatprep.subr.mxu0 0.0
      %891 = vmatpush1.xpose.msra.mxu0 %v817
      %892 = vmatprep.subr.mxu0 0.0
      %893 = vmatpush1.xpose.msra.mxu0 %v820
      %894 = vmatprep.subr.mxu0 0.0
      %895 = vmatpush1.xpose.msra.mxu0 %v823
      %896 = vmatprep.subr.mxu0 0.0
      %897 = vmatpush1.xpose.msra.mxu0 %v826
      %898 = vmatprep.subr.mxu0 0.0
      %899 = vmatpush1.xpose.msra.mxu0 %v829
      %900 = vmatprep.subr.mxu0 0.0
      %901 = vmatpush1.xpose.msra.mxu0 %v832
      %902 = vmatprep.subr.mxu0 0.0
      %903 = vmatpush1.xpose.msra.mxu0 %v835
      %904 = vmatprep.subr.mxu0 0.0
      %905 = vmatpush1.xpose.msra.mxu0 %v838
      %906 = vmatprep.subr.mxu0 0.0
      %907 = vmatpush1.xpose.msra.mxu0 %v841
      %908 = vmatprep.subr.mxu0 0.0
      %909 = vmatpush1.xpose.msra.mxu0 %v844
      %910 = vmatprep.mubr.f32.mxu0 0.0
      %911 = vmatmul.mubr.f32.gmra.mrb[0].mxu0 %v748
      %v912 = vpop.f32.mrb[0].mxu0
      %v913 = vadd.f32 0.0, %v912
      %v914 = vpop.f32.mrb[0].mxu0
      %v915 = vadd.f32 0.0, %v914
      %916 = vdwg.mxu0
      %v918 = vsel %vm746, %v743, 0
      %v921 = vsel %vm746, %v707, 0
      %v924 = vsel %vm746, %v708, 0
      %926 = vmatprep.subr.mxu0 0.0
      %927 = vmatpush1.xpose.msra.mxu0 %v921
      %928 = vmatprep.subr.mxu0 0.0
      %929 = vmatpush1.xpose.msra.mxu0 %v924
      %930 = vmatprep.subr.mxu0 0.0
      %931 = vmatpush1.xpose.msra.mxu0 %v751
      %932 = vmatprep.subr.mxu0 0.0
      %933 = vmatpush1.xpose.msra.mxu0 %v754
      %934 = vmatprep.subr.mxu0 0.0
      %935 = vmatpush1.xpose.msra.mxu0 %v757
      %936 = vmatprep.subr.mxu0 0.0
      %937 = vmatpush1.xpose.msra.mxu0 %v760
      %938 = vmatprep.subr.mxu0 0.0
      %939 = vmatpush1.xpose.msra.mxu0 %v763
      %940 = vmatprep.subr.mxu0 0.0
      %941 = vmatpush1.xpose.msra.mxu0 %v766
      %942 = vmatprep.subr.mxu0 0.0
      %943 = vmatpush1.xpose.msra.mxu0 %v769
      %944 = vmatprep.subr.mxu0 0.0
      %945 = vmatpush1.xpose.msra.mxu0 %v772
      %946 = vmatprep.subr.mxu0 0.0
      %947 = vmatpush1.xpose.msra.mxu0 %v775
      %948 = vmatprep.subr.mxu0 0.0
      %949 = vmatpush1.xpose.msra.mxu0 %v778
      %950 = vmatprep.subr.mxu0 0.0
      %951 = vmatpush1.xpose.msra.mxu0 %v781
      %952 = vmatprep.subr.mxu0 0.0
      %953 = vmatpush1.xpose.msra.mxu0 %v784
      %954 = vmatprep.subr.mxu0 0.0
      %955 = vmatpush1.xpose.msra.mxu0 %v787
      %956 = vmatprep.subr.mxu0 0.0
      %957 = vmatpush1.xpose.msra.mxu0 %v790
      %958 = vmatprep.subr.mxu0 0.0
      %959 = vmatpush1.xpose.msra.mxu0 %v793
      %960 = vmatprep.subr.mxu0 0.0
      %961 = vmatpush1.xpose.msra.mxu0 %v796
      %962 = vmatprep.subr.mxu0 0.0
      %963 = vmatpush1.xpose.msra.mxu0 %v799
      %964 = vmatprep.subr.mxu0 0.0
      %965 = vmatpush1.xpose.msra.mxu0 %v802
      %966 = vmatprep.subr.mxu0 0.0
      %967 = vmatpush1.xpose.msra.mxu0 %v805
      %968 = vmatprep.subr.mxu0 0.0
      %969 = vmatpush1.xpose.msra.mxu0 %v808
      %970 = vmatprep.subr.mxu0 0.0
      %971 = vmatpush1.xpose.msra.mxu0 %v811
      %972 = vmatprep.subr.mxu0 0.0
      %973 = vmatpush1.xpose.msra.mxu0 %v814
      %974 = vmatprep.subr.mxu0 0.0
      %975 = vmatpush1.xpose.msra.mxu0 %v817
      %976 = vmatprep.subr.mxu0 0.0
      %977 = vmatpush1.xpose.msra.mxu0 %v820
      %978 = vmatprep.subr.mxu0 0.0
      %979 = vmatpush1.xpose.msra.mxu0 %v823
      %980 = vmatprep.subr.mxu0 0.0
      %981 = vmatpush1.xpose.msra.mxu0 %v826
      %982 = vmatprep.subr.mxu0 0.0
      %983 = vmatpush1.xpose.msra.mxu0 %v829
      %984 = vmatprep.subr.mxu0 0.0
      %985 = vmatpush1.xpose.msra.mxu0 %v832
      %986 = vmatprep.subr.mxu0 0.0
      %987 = vmatpush1.xpose.msra.mxu0 %v835
      %988 = vmatprep.subr.mxu0 0.0
      %989 = vmatpush1.xpose.msra.mxu0 %v838
      %990 = vmatprep.mubr.f32.mxu0 0.0
      %991 = vmatmul.mubr.f32.gmra.mrb[0].mxu0 %v918
      %v992 = vpop.f32.mrb[0].mxu0
      %v993 = vadd.f32 %v913, %v992
      %v994 = vpop.f32.mrb[0].mxu0
      %v995 = vadd.f32 %v915, %v994
      %996 = vdwg.mxu0
      %s997 = scalar_lea.vmem %s252, 16
      %v998 = vld [vmem:[%s997] sm:$0xff]
      %v1000 = vsel %vm746, %v998, 0
      %v1003 = vsel %vm746, %v741, 0
      %v1006 = vsel %vm746, %v742, 0
      %1008 = vmatprep.subr.mxu0 0.0
      %1009 = vmatpush1.xpose.msra.mxu0 %v757
      %1010 = vmatprep.subr.mxu0 0.0
      %1011 = vmatpush1.xpose.msra.mxu0 %v760
      %1012 = vmatprep.subr.mxu0 0.0
      %1013 = vmatpush1.xpose.msra.mxu0 %v763
      %1014 = vmatprep.subr.mxu0 0.0
      %1015 = vmatpush1.xpose.msra.mxu0 %v766
      %1016 = vmatprep.subr.mxu0 0.0
      %1017 = vmatpush1.xpose.msra.mxu0 %v769
      %1018 = vmatprep.subr.mxu0 0.0
      %1019 = vmatpush1.xpose.msra.mxu0 %v772
      %1020 = vmatprep.subr.mxu0 0.0
      %1021 = vmatpush1.xpose.msra.mxu0 %v775
      %1022 = vmatprep.subr.mxu0 0.0
      %1023 = vmatpush1.xpose.msra.mxu0 %v778
      %1024 = vmatprep.subr.mxu0 0.0
      %1025 = vmatpush1.xpose.msra.mxu0 %v781
      %1026 = vmatprep.subr.mxu0 0.0
      %1027 = vmatpush1.xpose.msra.mxu0 %v784
      %1028 = vmatprep.subr.mxu0 0.0
      %1029 = vmatpush1.xpose.msra.mxu0 %v787
      %1030 = vmatprep.subr.mxu0 0.0
      %1031 = vmatpush1.xpose.msra.mxu0 %v790
      %1032 = vmatprep.subr.mxu0 0.0
      %1033 = vmatpush1.xpose.msra.mxu0 %v793
      %1034 = vmatprep.subr.mxu0 0.0
      %1035 = vmatpush1.xpose.msra.mxu0 %v796
      %1036 = vmatprep.subr.mxu0 0.0
      %1037 = vmatpush1.xpose.msra.mxu0 %v799
      %1038 = vmatprep.subr.mxu0 0.0
      %1039 = vmatpush1.xpose.msra.mxu0 %v802
      %1040 = vmatprep.subr.mxu0 0.0
      %1041 = vmatpush1.xpose.msra.mxu0 %v805
      %1042 = vmatprep.subr.mxu0 0.0
      %1043 = vmatpush1.xpose.msra.mxu0 %v808
      %1044 = vmatprep.subr.mxu0 0.0
      %1045 = vmatpush1.xpose.msra.mxu0 %v811
      %1046 = vmatprep.subr.mxu0 0.0
      %1047 = vmatpush1.xpose.msra.mxu0 %v814
      %1048 = vmatprep.subr.mxu0 0.0
      %1049 = vmatpush1.xpose.msra.mxu0 %v817
      %1050 = vmatprep.subr.mxu0 0.0
      %1051 = vmatpush1.xpose.msra.mxu0 %v820
      %1052 = vmatprep.subr.mxu0 0.0
      %1053 = vmatpush1.xpose.msra.mxu0 %v823
      %1054 = vmatprep.subr.mxu0 0.0
      %1055 = vmatpush1.xpose.msra.mxu0 %v826
      %1056 = vmatprep.subr.mxu0 0.0
      %1057 = vmatpush1.xpose.msra.mxu0 %v829
      %1058 = vmatprep.subr.mxu0 0.0
      %1059 = vmatpush1.xpose.msra.mxu0 %v832
      %1060 = vmatprep.subr.mxu0 0.0
      %1061 = vmatpush1.xpose.msra.mxu0 %v835
      %1062 = vmatprep.subr.mxu0 0.0
      %1063 = vmatpush1.xpose.msra.mxu0 %v838
      %1064 = vmatprep.subr.mxu0 0.0
      %1065 = vmatpush1.xpose.msra.mxu0 %v841
      %1066 = vmatprep.subr.mxu0 0.0
      %1067 = vmatpush1.xpose.msra.mxu0 %v844
      %1068 = vmatprep.subr.mxu0 0.0
      %1069 = vmatpush1.xpose.msra.mxu0 %v1003
      %1070 = vmatprep.subr.mxu0 0.0
      %1071 = vmatpush1.xpose.msra.mxu0 %v1006
      %1072 = vmatprep.mubr.f32.mxu0 0.0
      %1073 = vmatmul.mubr.f32.gmra.mrb[0].mxu0 %v1000
      %v1074 = vpop.f32.mrb[0].mxu0
      %v1075 = vadd.f32 0.0, %v1074
      %v1076 = vpop.f32.mrb[0].mxu0
      %v1077 = vadd.f32 0.0, %v1076
      %1078 = vdwg.mxu0
      %v1079 = vadd.f32 %v993, %v1075
      %v1080 = vadd.f32 %v995, %v1077
      %v1081 = vld [vmem:[%s256] sm:$0xff]
      %1083 = vset.pattern.permute.xlu0 0
      %1084 = vperm.xlu0 %1083, %v1081
      %v1085 = vpop.permute.xlu0 %1084
      %v1087 = vadd.f32 %v1079, %v1085
      %v1088 = vadd.f32 %v1080, %v1085
      %vm1089 = vcmp.ge.f32.partialorder %v1087, 0.0
      %vm1090 = vcmp.ge.f32.partialorder %v1088, 0.0
      %v1091 = vmul.f32 %v1087, 0.01
      %v1092 = vmul.f32 %v1088, 0.01
      %v1093 = vsel %vm1089, %v1087, %v1091
      %v1094 = vsel %vm1090, %v1088, %v1092
      %v1095 = vadd.f32 %v1093, %v1094
      %1096 = vadd.xlane.f32.xlu0 %v1095
      %v1097 = vpop.xlane.xlu0 %1096
      %vm1098 = vcmask 7168
      %1099 = vst.msk [vmem:[%s272] sm:$0xff] %vm1098, %v1097
      %v1100 = vmul.f32 %v1093, %v1093
      %v1101 = vmul.f32 %v1094, %v1094
      %v1102 = vadd.f32 %v1100, %v1101
      %1103 = vadd.xlane.f32.xlu0 %v1102
      %v1104 = vpop.xlane.xlu0 %1103
      %vm1105 = vcmask 15368
      %1106 = vst.msk [vmem:[%s272] sm:$0xff] %vm1105, %v1104
      %1107 = vst [vmem:[%s265] sm:$0xff] %v1093
      %1108 = vst [vmem:[%s265 + $0x8] sm:$0xff] %v1094
      %p1109 = scmp.lt.s32.totalorder %s20, 1
      %s1110 = scalar_select %p1109, %s20, 1
      %p1111 = scmp.lt.s32.totalorder %s21, 0
      %s1112 = scalar_select %p1111, %s21, 0
      %s1113 = smul.addr %s1112, 2
      %s1114 = smul.addr %s1110, 2
      %s1115 = sadd.s32 %s1113, %s1114
      %s1116 = smul.addr %s1115, 8
      %s1117 = scalar_lea.vmem %s3, %s1116
      %p1118 = scmp.lt.s32.totalorder %s20, 1
      %s1119 = scalar_select %p1118, %s20, 1
      %p1120 = scmp.lt.s32.totalorder %s21, 0
      %s1121 = scalar_select %p1120, %s21, 0
      %s1122 = sadd.s32 %s1121, %s1119
      %s1123 = smul.addr %s1122, 8
      %s1124 = scalar_lea.vmem %s4, %s1123
      // Predicated region
      $region33: #{msunet_conv_block.2} parent=31 // pred_check
        %p1125 = pneg %p126
      $region34: #{msunet_conv_block.2} parent=31 // pred_check_branch
        %1127 = sbr.rel (%p1125) target = $region36
      $region35: #{msunet_conv_block.2} parent=31 // pred_region
        _
      $region36: #{msunet_conv_block.2} parent=31 // pred_fallthru
        _
      // Predicated region
      $region37: #{msunet_conv_block.2} parent=31 // pred_check
        %p1128 = pneg %p154
      $region38: #{msunet_conv_block.2} parent=31 // pred_check_branch
        %1130 = sbr.rel (%p1128) target = $region40
      $region39: #{msunet_conv_block.2} parent=31 // pred_region
        _
      $region40: #{msunet_conv_block.2} parent=31 // pred_fallthru
        _
    $region32: #{msunet_conv_block.2} parent=5 // pred_fallthru
      _
    %p1131 = scmp.le.s32.totalorder 2, %s11
    // Predicated region
    $region41: #{msunet_conv_block.2} parent=5 // pred_check
      %p1132 = pneg %p1131
    $region42: #{msunet_conv_block.2} parent=5 // pred_check_branch
      %1134 = sbr.rel (%p1132) target = $region44
    $region43: #{msunet_conv_block.2} parent=5 // pred_region
      %s1135 = ssub.s32 %s11, 2
      // Predicated region
      $region45: #{msunet_conv_block.2} parent=43 // pred_check
        %p1136 = pneg %p132
      $region46: #{msunet_conv_block.2} parent=43 // pred_check_branch
        %1138 = sbr.rel (%p1136) target = $region48
      $region47: #{msunet_conv_block.2} parent=43 // pred_region
        %p1139 = scmp.lt.s32.totalorder %s22, 1
        %s1140 = scalar_select %p1139, %s22, 1
        %p1141 = scmp.lt.s32.totalorder %s23, 0
        %s1142 = scalar_select %p1141, %s23, 0
        %s1143 = smul.addr %s1142, 2
        %s1144 = smul.addr %s1140, 2
        %s1145 = sadd.s32 %s1143, %s1144
        %s1146 = smul.addr %s1145, 8
        %s1147 = scalar_lea.vmem %s3, %s1146
      $region48: #{msunet_conv_block.2} parent=43 // pred_fallthru
        _
      // Predicated region
      $region49: #{msunet_conv_block.2} parent=43 // pred_check
        %p1148 = pneg %p160
      $region50: #{msunet_conv_block.2} parent=43 // pred_check_branch
        %1150 = sbr.rel (%p1148) target = $region52
      $region51: #{msunet_conv_block.2} parent=43 // pred_region
        %p1151 = scmp.lt.s32.totalorder %s22, 1
        %s1152 = scalar_select %p1151, %s22, 1
        %p1153 = scmp.lt.s32.totalorder %s23, 0
        %s1154 = scalar_select %p1153, %s23, 0
        %s1155 = sadd.s32 %s1154, %s1152
        %s1156 = smul.addr %s1155, 8
        %s1157 = scalar_lea.vmem %s4, %s1156
      $region52: #{msunet_conv_block.2} parent=43 // pred_fallthru
        _
    $region44: #{msunet_conv_block.2} parent=5 // pred_fallthru
      _
  $region6: #{msunet_conv_block.2} parent=0 // loop_footer
    %s15 = sadd.s32 1, %s11
  $region7: #{msunet_conv_block.2} parent=0 // loop_footer_branch
    %10 = sbr.rel target = $region3
  $region8: #{msunet_conv_block.2} parent=0 // loop_exit
    _

</llo_original>
